<compile_context>
chip_gen: v6e
topology: v6e:2x2x1
jax: 0.10.0
libtpu: 0.0.40
codegen_flags: <defaults>
</compile_context>

<pallas_src>
import functools

import jax
import jax.numpy as jnp
from jax.experimental import pallas as pl
from jax.experimental.pallas import tpu as pltpu

HIDDEN = 128                 # MLP hidden size (fc1 out)
OUT = 128                    # MLP output size
TM_MAX = 1024                # row-tile cap (keeps v5e default scoped VMEM happy)
NORM_EPS = 1e-8              # Normalizer eps
LN_EPS = 1e-5                # torch.nn.LayerNorm default eps
OUT_DTYPE = jnp.bfloat16     # latent dtype (use jnp.float32 for exact parity)


# ---------------------------------------------------------------------------
# kernels
# ---------------------------------------------------------------------------
def _layer_norm(y, gamma, beta):
    """Single-pass LayerNorm over the last dim; all statistics in f32."""
    mu = jnp.mean(y, axis=-1, keepdims=True)
    ms = jnp.mean(y * y, axis=-1, keepdims=True)
    var = ms - mu * mu                       # == E[(y - mu)^2], one pass
    return (y - mu) * jax.lax.rsqrt(var + LN_EPS) * gamma + beta


def node_kernel(vel_ref, typ_ref, w1v_ref, w1t_ref, b1_ref, w2_ref, b2_ref,
                g_ref, beta_ref, o_ref):
    # fc1 (K = state_size + 9, Normalizer folded at prep time) as f32 VPU
    # broadcast-FMAs: no tiny-K MXU passes, no bf16 packing of the narrow
    # (tm,2)/(tm,9) operands.  Weights/activations stay f32 here (the folded
    # 1/(std+eps) scale can inflate weight magnitudes; bf16 would drift).
    vel = vel_ref[...]                        # (tm, S) f32
    typ = typ_ref[...]                        # (tm, T) f32
    h = b1_ref[...]                           # (1, 128) -> broadcasts to (tm, 128)
    for k in range(vel.shape[1]):
        h = h + vel[:, k:k + 1] * w1v_ref[k:k + 1, :]
    for k in range(typ.shape[1]):
        h = h + typ[:, k:k + 1] * w1t_ref[k:k + 1, :]
    h = jnp.maximum(h, 0.0)
    # fc2 on the MXU, bf16 operands / f32 accumulate.
    y = jnp.dot(h.astype(jnp.bfloat16), w2_ref[...],
                preferred_element_type=jnp.float32) + b2_ref[...]
    o_ref[...] = _layer_norm(y, g_ref[...], beta_ref[...]).astype(o_ref.dtype)


def edge_kernel(s_ref, r_ref, w1_ref, b1_ref, w2_ref, b2_ref, g_ref, beta_ref,
                o_ref):
    # NOTE: rows past the ragged tail hold uninitialized data (sqrt may yield
    # NaN there); they are per-row independent and dropped on writeback.
    dist = s_ref[...] - r_ref[...]            # (tm, 2) f32
    dx = dist[:, 0:1]                         # (tm, 1)
    dy = dist[:, 1:2]                         # (tm, 1)
    nrm = jnp.sqrt(dx * dx + dy * dy)         # (tm, 1)
    # fc1 (K=3, Normalizer folded) as three f32 VPU broadcast-FMAs.
    h = (dx * w1_ref[0:1, :] + dy * w1_ref[1:2, :] + nrm * w1_ref[2:3, :]
         + b1_ref[...])
    h = jnp.maximum(h, 0.0)
    y = jnp.dot(h.astype(jnp.bfloat16), w2_ref[...],
                preferred_element_type=jnp.float32) + b2_ref[...]
    o_ref[...] = _layer_norm(y, g_ref[...], beta_ref[...]).astype(o_ref.dtype)


# ---------------------------------------------------------------------------
# pallas_call wrappers
# ---------------------------------------------------------------------------
def _round_up(x, m):
    return ((x + m - 1) // m) * m


def _choose_tm(m):
    """Row tile: >=2 (even #) grid steps when possible (v7x has 2 TCs), cap at
    TM_MAX, 16-row alignment (sublane tile for the bf16 output)."""
    if m <= 2 * TM_MAX:
        tm = -(-m // 2)                       # exactly 2 steps when m > 16
    else:
        steps = 2 * (-(-m // (2 * TM_MAX)))   # even step count for megacore
        tm = -(-m // steps)
    return int(max(16, min(TM_MAX, _round_up(tm, 16))))


def _rep(shape):
    """Parameter block replicated to every grid step (kept whole in VMEM)."""
    return pl.BlockSpec(shape, lambda i: (0, 0))


def run_node_path(vel, typ, params, out_dtype):
    """vel: (M, S) f32, typ: (M, T) f32 -> (M, 128) out_dtype."""
    m, s = vel.shape
    t = typ.shape[1]
    tm = _choose_tm(m)
    return pl.pallas_call(
        node_kernel,
        out_shape=jax.ShapeDtypeStruct((m, OUT), out_dtype),
        grid=(pl.cdiv(m, tm),),
        in_specs=[pl.BlockSpec((tm, s), lambda i: (i, 0)),
                  pl.BlockSpec((tm, t), lambda i: (i, 0)),
                  _rep((s, HIDDEN)),       # fc1 weight, velocity rows (f32)
                  _rep((t, HIDDEN)),       # fc1 weight, node-type rows (f32)
                  _rep((1, HIDDEN)),       # fc1 bias (normalizer-folded, f32)
                  _rep((HIDDEN, OUT)),     # fc2 weight (bf16)
                  _rep((1, OUT)),          # fc2 bias (f32)
                  _rep((1, OUT)),          # layernorm gamma
                  _rep((1, OUT))],         # layernorm beta
        out_specs=pl.BlockSpec((tm, OUT), lambda i: (i, 0)),
        compiler_params=pltpu.CompilerParams(dimension_semantics=("parallel",)),
    )(vel, typ, *params)


def run_edge_path(senders, receivers, params, out_dtype):
    """senders, receivers: (M, 2) f32 -> (M, 128) out_dtype."""
    m = senders.shape[0]
    tm = _choose_tm(m)
    return pl.pallas_call(
        edge_kernel,
        out_shape=jax.ShapeDtypeStruct((m, OUT), out_dtype),
        grid=(pl.cdiv(m, tm),),
        in_specs=[pl.BlockSpec((tm, 2), lambda i: (i, 0)),
                  pl.BlockSpec((tm, 2), lambda i: (i, 0)),
                  _rep((3, HIDDEN)),       # fc1 weight (normalizer-folded, f32)
                  _rep((1, HIDDEN)),       # fc1 bias (f32)
                  _rep((HIDDEN, OUT)),     # fc2 weight (bf16)
                  _rep((1, OUT)),          # fc2 bias (f32)
                  _rep((1, OUT)),          # layernorm gamma
                  _rep((1, OUT))],         # layernorm beta
        out_specs=pl.BlockSpec((tm, OUT), lambda i: (i, 0)),
        compiler_params=pltpu.CompilerParams(dimension_semantics=("parallel",)),
    )(senders, receivers, *params)


# ---------------------------------------------------------------------------
# parameters
# ---------------------------------------------------------------------------
def init_mlp_params(key, din):
    """Raw PyTorch-equivalent MLP + Normalizer parameters (eval-mode buffers)."""
    k1, k2, k3, k4 = jax.random.split(key, 4)
    scale1 = 1.0 / jnp.sqrt(jnp.float32(din))
    scale2 = 1.0 / jnp.sqrt(jnp.float32(HIDDEN))
    mean = jnp.zeros((1, din), jnp.float32)            # Normalizer mean buffer
    std = jnp.ones((1, din), jnp.float32)              # Normalizer std buffer
    w1 = jax.random.uniform(k1, (din, HIDDEN), jnp.float32, -scale1, scale1)
    b1 = jax.random.uniform(k2, (1, HIDDEN), jnp.float32, -scale1, scale1)
    w2 = jax.random.uniform(k3, (HIDDEN, OUT), jnp.float32, -scale2, scale2)
    b2 = jax.random.uniform(k4, (1, OUT), jnp.float32, -scale2, scale2)
    gamma = jnp.ones((1, OUT), jnp.float32)            # LayerNorm weight
    beta = jnp.zeros((1, OUT), jnp.float32)            # LayerNorm bias
    return (mean, std, w1, b1, w2, b2, gamma, beta)


def _fold_normalizer(mean, std, w1, b1):
    """Fold eval-mode (x - mean)/(std + eps) into fc1 (exact, done in f32)."""
    inv = 1.0 / (std + NORM_EPS)                       # (1, din)
    w1f = w1 * inv.reshape(-1, 1)                      # (din, 128)
    b1f = b1 - jnp.dot(mean * inv, w1)                 # (1, 128)
    return w1f, b1f


def prepare_node_params(raw, state_size):
    mean, std, w1, b1, w2, b2, gamma, beta = raw
    w1f, b1f = _fold_normalizer(mean, std, w1, b1)
    w1v = w1f[:state_size]                             # velocity rows (f32)
    w1t = w1f[state_size:]                             # node-type rows (f32)
    return (w1v, w1t, b1f, w2.astype(jnp.bfloat16), b2, gamma, beta)


def prepare_edge_params(raw):
    mean, std, w1, b1, w2, b2, gamma, beta = raw
    w1f, b1f = _fold_normalizer(mean, std, w1, b1)
    return (w1f, b1f, w2.astype(jnp.bfloat16), b2, gamma, beta)


# ---------------------------------------------------------------------------
# Encoder forward
# ---------------------------------------------------------------------------
def encoder_forward(mesh_pos, edges, node_type, velocity, node_params,
                    edge_params, out_dtype=OUT_DTYPE):
    """Pallas implementation of Encoder.forward (eval mode).

    mesh_pos:  (B, N, 2) f32
    edges:     (B, E, 2) int32 node indices
    node_type: (B, N, 9) f32
    velocity:  (B, N, state_size) f32
    returns (V, E) = ((B, N, 128), (B, E, 128)), both out_dtype.
    """
    B, N, _ = mesh_pos.shape
    _, E, _ = edges.shape
    S = velocity.shape[-1]
    T = node_type.shape[-1]

    # --- node path: velocity / node_type streamed separately (no HBM concat) ---
    v_out = run_node_path(velocity.reshape(B * N, S),
                          node_type.reshape(B * N, T), node_params, out_dtype)
    v_out = v_out.reshape(B, N, OUT)

    # --- edge path: data-dependent gather stays in XLA glue ---
    # TODO(synk): in-kernel gather (mesh_pos resident in VMEM + int32 edge tile)
    # would remove the two (B, E, 2) HBM intermediates; payoff only at large E.
    idx_s = jnp.broadcast_to(edges[..., 0:1], (B, E, 2))
    idx_r = jnp.broadcast_to(edges[..., 1:2], (B, E, 2))
    senders = jnp.take_along_axis(mesh_pos, idx_s, axis=1)       # (B, E, 2)
    receivers = jnp.take_along_axis(mesh_pos, idx_r, axis=1)     # (B, E, 2)
    e_out = run_edge_path(senders.reshape(B * E, 2),
                          receivers.reshape(B * E, 2), edge_params, out_dtype)
    return v_out, e_out.reshape(B, E, OUT)


# ---------------------------------------------------------------------------
# pure-JAX reference (mirrors the eval-mode PyTorch forward)
# ---------------------------------------------------------------------------
def _mlp_reference(x, raw):
    mean, std, w1, b1, w2, b2, gamma, beta = raw
    xn = (x - mean) / (std + NORM_EPS)
    h = jnp.maximum(jnp.dot(xn, w1) + b1, 0.0)
    y = jnp.dot(h, w2) + b2
    mu = jnp.mean(y, axis=-1, keepdims=True)
    var = jnp.mean(jnp.square(y - mu), axis=-1, keepdims=True)
    return (y - mu) * jax.lax.rsqrt(var + LN_EPS) * gamma + beta


def encoder_reference(mesh_pos, edges, node_type, velocity, node_raw, edge_raw):
    V = _mlp_reference(jnp.concatenate([velocity, node_type], -1), node_raw)
    B, E, _ = edges.shape
    idx_s = jnp.broadcast_to(edges[..., 0:1], (B, E, 2))
    idx_r = jnp.broadcast_to(edges[..., 1:2], (B, E, 2))
    senders = jnp.take_along_axis(mesh_pos, idx_s, axis=1)
    receivers = jnp.take_along_axis(mesh_pos, idx_r, axis=1)
    dist = senders - receivers
    nrm = jnp.sqrt(jnp.sum(dist * dist, -1, keepdims=True))
    Ef = _mlp_reference(jnp.concatenate([dist, nrm], -1), edge_raw)
    return V, Ef


if __name__ == "__main__":
    key = jax.random.PRNGKey(0)
    k_mesh, k_vel, k_type, k_edge, k_pn, k_pe = jax.random.split(key, 6)

    # Small shapes; sized so both grids have 2 steps and a ragged last block.
    B, N, E_CNT, STATE = 2, 20, 26, 2

    mesh_pos = jax.random.normal(k_mesh, (B, N, 2), jnp.float32)
    velocity = jax.random.normal(k_vel, (B, N, STATE), jnp.float32)
    type_ids = jax.random.randint(k_type, (B, N), 0, 9)
    node_type = jax.nn.one_hot(type_ids, 9, dtype=jnp.float32)
    edges = jax.random.randint(k_edge, (B, E_CNT, 2), 0, N, dtype=jnp.int32)

    node_raw = init_mlp_params(k_pn, 9 + STATE)   # fv + normalize_nodes
    edge_raw = init_mlp_params(k_pe, 3)           # fe + normalize_edges
    node_params = prepare_node_params(node_raw, STATE)
    edge_params = prepare_edge_params(edge_raw)

    fwd = jax.jit(functools.partial(encoder_forward,
                                    node_params=node_params,
                                    edge_params=edge_params))
    V, Eo = fwd(mesh_pos, edges, node_type, velocity)
    jax.block_until_ready((V, Eo))

    assert V.shape == (B, N, OUT) and Eo.shape == (B, E_CNT, OUT)
    assert V.dtype == OUT_DTYPE and Eo.dtype == OUT_DTYPE

    # Correctness vs. the eval-mode PyTorch-equivalent reference.
    V_ref, E_ref = encoder_reference(mesh_pos, edges, node_type, velocity,
                                     node_raw, edge_raw)
    v_err = float(jnp.max(jnp.abs(V.astype(jnp.float32) - V_ref)))
    e_err = float(jnp.max(jnp.abs(Eo.astype(jnp.float32) - E_ref)))
    assert v_err < 0.1 and e_err < 0.1, (v_err, e_err)
    assert bool(jnp.all(jnp.isfinite(V.astype(jnp.float32))))
    assert bool(jnp.all(jnp.isfinite(Eo.astype(jnp.float32))))
    print("KERNEL_OK")
</pallas_src>

<mosaic_0001>
module attributes {stable_mosaic.version = 11 : i64} {
  func.func @edge_kernel(%arg0: i32, %arg1: memref<32x2xf32, #tpu.memory_space<vmem>>, %arg2: memref<32x2xf32, #tpu.memory_space<vmem>>, %arg3: memref<3x128xf32, #tpu.memory_space<vmem>>, %arg4: memref<1x128xf32, #tpu.memory_space<vmem>>, %arg5: memref<128x128xbf16, #tpu.memory_space<vmem>>, %arg6: memref<1x128xf32, #tpu.memory_space<vmem>>, %arg7: memref<1x128xf32, #tpu.memory_space<vmem>>, %arg8: memref<1x128xf32, #tpu.memory_space<vmem>>, %arg9: memref<32x128xbf16, #tpu.memory_space<vmem>>) attributes {dimension_semantics = [#tpu.dimension_semantics<parallel>], iteration_bounds = array<i64: 2>, scalar_prefetch = 0 : i64, scratch_operands = 0 : i64, tpu.core_type = #tpu.core_type<tc>, window_params = [{transform_indices = @transform_0, window_bounds = array<i64: 32, 2>}, {transform_indices = @transform_1, window_bounds = array<i64: 32, 2>}, {pipeline_mode = #tpu.pipeline_mode<synchronous>, transform_indices = @transform_2, window_bounds = array<i64: 3, 128>}, {pipeline_mode = #tpu.pipeline_mode<synchronous>, transform_indices = @transform_3, window_bounds = array<i64: 1, 128>}, {pipeline_mode = #tpu.pipeline_mode<synchronous>, transform_indices = @transform_4, window_bounds = array<i64: 128, 128>}, {pipeline_mode = #tpu.pipeline_mode<synchronous>, transform_indices = @transform_5, window_bounds = array<i64: 1, 128>}, {pipeline_mode = #tpu.pipeline_mode<synchronous>, transform_indices = @transform_6, window_bounds = array<i64: 1, 128>}, {pipeline_mode = #tpu.pipeline_mode<synchronous>, transform_indices = @transform_7, window_bounds = array<i64: 1, 128>}, {transform_indices = @transform_8, window_bounds = array<i64: 32, 128>}]} {
    %c0 = arith.constant 0 : index
    %c0_0 = arith.constant 0 : index
    %0 = vector.load %arg1[%c0, %c0_0] : memref<32x2xf32, #tpu.memory_space<vmem>>, vector<32x2xf32>
    %c0_1 = arith.constant 0 : index
    %c0_2 = arith.constant 0 : index
    %1 = vector.load %arg2[%c0_1, %c0_2] : memref<32x2xf32, #tpu.memory_space<vmem>>, vector<32x2xf32>
    %2 = arith.subf %0, %1 : vector<32x2xf32>
    %3 = vector.extract_strided_slice %2 {offsets = [0, 0], sizes = [32, 1], strides = [1, 1]} : vector<32x2xf32> to vector<32x1xf32>
    %4 = vector.extract_strided_slice %2 {offsets = [0, 1], sizes = [32, 1], strides = [1, 1]} : vector<32x2xf32> to vector<32x1xf32>
    %5 = arith.mulf %3, %3 : vector<32x1xf32>
    %6 = arith.mulf %4, %4 : vector<32x1xf32>
    %7 = arith.addf %5, %6 : vector<32x1xf32>
    %8 = math.sqrt %7 : vector<32x1xf32>
    %c0_3 = arith.constant 0 : index
    %c0_4 = arith.constant 0 : index
    %9 = vector.load %arg3[%c0_3, %c0_4] : memref<3x128xf32, #tpu.memory_space<vmem>>, vector<1x128xf32>
    %10 = vector.broadcast %3 : vector<32x1xf32> to vector<32x128xf32>
    %11 = vector.broadcast %9 : vector<1x128xf32> to vector<32x128xf32>
    %12 = arith.mulf %10, %11 : vector<32x128xf32>
    %c1 = arith.constant 1 : index
    %c0_5 = arith.constant 0 : index
    %13 = vector.load %arg3[%c1, %c0_5] : memref<3x128xf32, #tpu.memory_space<vmem>>, vector<1x128xf32>
    %14 = vector.broadcast %4 : vector<32x1xf32> to vector<32x128xf32>
    %15 = vector.broadcast %13 : vector<1x128xf32> to vector<32x128xf32>
    %16 = arith.mulf %14, %15 : vector<32x128xf32>
    %17 = arith.addf %12, %16 : vector<32x128xf32>
    %c2 = arith.constant 2 : index
    %c0_6 = arith.constant 0 : index
    %18 = vector.load %arg3[%c2, %c0_6] : memref<3x128xf32, #tpu.memory_space<vmem>>, vector<1x128xf32>
    %19 = vector.broadcast %8 : vector<32x1xf32> to vector<32x128xf32>
    %20 = vector.broadcast %18 : vector<1x128xf32> to vector<32x128xf32>
    %21 = arith.mulf %19, %20 : vector<32x128xf32>
    %22 = arith.addf %17, %21 : vector<32x128xf32>
    %c0_7 = arith.constant 0 : index
    %c0_8 = arith.constant 0 : index
    %23 = vector.load %arg4[%c0_7, %c0_8] : memref<1x128xf32, #tpu.memory_space<vmem>>, vector<1x128xf32>
    %24 = vector.broadcast %23 : vector<1x128xf32> to vector<32x128xf32>
    %25 = arith.addf %22, %24 : vector<32x128xf32>
    %cst = arith.constant 0.000000e+00 : f32
    %26 = vector.broadcast %cst : f32 to vector<32x128xf32>
    %27 = arith.maximumf %25, %26 : vector<32x128xf32>
    %28 = arith.truncf %27 : vector<32x128xf32> to vector<32x128xbf16>
    %c0_9 = arith.constant 0 : index
    %c0_10 = arith.constant 0 : index
    %29 = vector.load %arg5[%c0_9, %c0_10] : memref<128x128xbf16, #tpu.memory_space<vmem>>, vector<128x128xbf16>
    %cst_11 = arith.constant dense<0.000000e+00> : vector<32x128xf32>
    %30 = tpu.matmul %28, %29, %cst_11 {dimension_numbers = #tpu.dot_dimension_numbers<[1], [0], [0], [1], [0, 0, 1, 1], [], []>} : vector<32x128xbf16>, vector<128x128xbf16>, vector<32x128xf32> -> vector<32x128xf32>
    %c0_12 = arith.constant 0 : index
    %c0_13 = arith.constant 0 : index
    %31 = vector.load %arg6[%c0_12, %c0_13] : memref<1x128xf32, #tpu.memory_space<vmem>>, vector<1x128xf32>
    %32 = vector.broadcast %31 : vector<1x128xf32> to vector<32x128xf32>
    %33 = arith.addf %30, %32 : vector<32x128xf32>
    %c0_14 = arith.constant 0 : index
    %c0_15 = arith.constant 0 : index
    %34 = vector.load %arg7[%c0_14, %c0_15] : memref<1x128xf32, #tpu.memory_space<vmem>>, vector<1x128xf32>
    %c0_16 = arith.constant 0 : index
    %c0_17 = arith.constant 0 : index
    %35 = vector.load %arg8[%c0_16, %c0_17] : memref<1x128xf32, #tpu.memory_space<vmem>>, vector<1x128xf32>
    %cst_18 = arith.constant dense<0.000000e+00> : vector<32xf32>
    %36 = vector.multi_reduction <add>, %33, %cst_18 [1] : vector<32x128xf32> to vector<32xf32>
    %37 = vector.shape_cast %36 : vector<32xf32> to vector<32x1xf32>
    %cst_19 = arith.constant 1.280000e+02 : f32
    %38 = vector.broadcast %cst_19 : f32 to vector<32x1xf32>
    %39 = arith.divf %37, %38 : vector<32x1xf32>
    %40 = arith.mulf %33, %33 : vector<32x128xf32>
    %cst_20 = arith.constant dense<0.000000e+00> : vector<32xf32>
    %41 = vector.multi_reduction <add>, %40, %cst_20 [1] : vector<32x128xf32> to vector<32xf32>
    %42 = vector.shape_cast %41 : vector<32xf32> to vector<32x1xf32>
    %cst_21 = arith.constant 1.280000e+02 : f32
    %43 = vector.broadcast %cst_21 : f32 to vector<32x1xf32>
    %44 = arith.divf %42, %43 : vector<32x1xf32>
    %45 = arith.mulf %39, %39 : vector<32x1xf32>
    %46 = arith.subf %44, %45 : vector<32x1xf32>
    %47 = vector.broadcast %39 : vector<32x1xf32> to vector<32x128xf32>
    %48 = arith.subf %33, %47 : vector<32x128xf32>
    %cst_22 = arith.constant 9.99999974E-6 : f32
    %49 = vector.broadcast %cst_22 : f32 to vector<32x1xf32>
    %50 = arith.addf %46, %49 : vector<32x1xf32>
    %51 = math.rsqrt %50 : vector<32x1xf32>
    %52 = vector.broadcast %51 : vector<32x1xf32> to vector<32x128xf32>
    %53 = arith.mulf %48, %52 : vector<32x128xf32>
    %54 = vector.broadcast %34 : vector<1x128xf32> to vector<32x128xf32>
    %55 = arith.mulf %53, %54 : vector<32x128xf32>
    %56 = vector.broadcast %35 : vector<1x128xf32> to vector<32x128xf32>
    %57 = arith.addf %55, %56 : vector<32x128xf32>
    %58 = arith.truncf %57 : vector<32x128xf32> to vector<32x128xbf16>
    %c0_23 = arith.constant 0 : index
    %c0_24 = arith.constant 0 : index
    %59 = vector.load %arg9[%c0_23, %c0_24] : memref<32x128xbf16, #tpu.memory_space<vmem>>, vector<32x128xbf16>
    tpu.vector_store %arg9[%c0_23, %c0_24], %58 {strides = array<i32>} : memref<32x128xbf16, #tpu.memory_space<vmem>>, vector<32x128xbf16>,
    return
  }
  func.func @transform_0(%arg0: i32) -> (i32, i32) {
    %c0_i32 = arith.constant 0 : i32
    %c0_i32_0 = arith.constant 0 : i32
    return %arg0, %c0_i32 : i32, i32
  }
  func.func @transform_1(%arg0: i32) -> (i32, i32) {
    %c0_i32 = arith.constant 0 : i32
    %c0_i32_0 = arith.constant 0 : i32
    return %arg0, %c0_i32 : i32, i32
  }
  func.func @transform_2(%arg0: i32) -> (i32, i32) {
    %c0_i32 = arith.constant 0 : i32
    %c0_i32_0 = arith.constant 0 : i32
    %c0_i32_1 = arith.constant 0 : i32
    return %c0_i32, %c0_i32_0 : i32, i32
  }
  func.func @transform_3(%arg0: i32) -> (i32, i32) {
    %c0_i32 = arith.constant 0 : i32
    %c0_i32_0 = arith.constant 0 : i32
    %c0_i32_1 = arith.constant 0 : i32
    return %c0_i32, %c0_i32_0 : i32, i32
  }
  func.func @transform_4(%arg0: i32) -> (i32, i32) {
    %c0_i32 = arith.constant 0 : i32
    %c0_i32_0 = arith.constant 0 : i32
    %c0_i32_1 = arith.constant 0 : i32
    return %c0_i32, %c0_i32_0 : i32, i32
  }
  func.func @transform_5(%arg0: i32) -> (i32, i32) {
    %c0_i32 = arith.constant 0 : i32
    %c0_i32_0 = arith.constant 0 : i32
    %c0_i32_1 = arith.constant 0 : i32
    return %c0_i32, %c0_i32_0 : i32, i32
  }
  func.func @transform_6(%arg0: i32) -> (i32, i32) {
    %c0_i32 = arith.constant 0 : i32
    %c0_i32_0 = arith.constant 0 : i32
    %c0_i32_1 = arith.constant 0 : i32
    return %c0_i32, %c0_i32_0 : i32, i32
  }
  func.func @transform_7(%arg0: i32) -> (i32, i32) {
    %c0_i32 = arith.constant 0 : i32
    %c0_i32_0 = arith.constant 0 : i32
    %c0_i32_1 = arith.constant 0 : i32
    return %c0_i32, %c0_i32_0 : i32, i32
  }
  func.func @transform_8(%arg0: i32) -> (i32, i32) {
    %c0_i32 = arith.constant 0 : i32
    %c0_i32_0 = arith.constant 0 : i32
    return %arg0, %c0_i32 : i32, i32
  }
}

module attributes {stable_mosaic.version = 11 : i64} {
  func.func @node_kernel(%arg0: i32, %arg1: memref<32x2xf32, #tpu.memory_space<vmem>>, %arg2: memref<32x9xf32, #tpu.memory_space<vmem>>, %arg3: memref<2x128xf32, #tpu.memory_space<vmem>>, %arg4: memref<9x128xf32, #tpu.memory_space<vmem>>, %arg5: memref<1x128xf32, #tpu.memory_space<vmem>>, %arg6: memref<128x128xbf16, #tpu.memory_space<vmem>>, %arg7: memref<1x128xf32, #tpu.memory_space<vmem>>, %arg8: memref<1x128xf32, #tpu.memory_space<vmem>>, %arg9: memref<1x128xf32, #tpu.memory_space<vmem>>, %arg10: memref<32x128xbf16, #tpu.memory_space<vmem>>) attributes {dimension_semantics = [#tpu.dimension_semantics<parallel>], iteration_bounds = array<i64: 2>, scalar_prefetch = 0 : i64, scratch_operands = 0 : i64, tpu.core_type = #tpu.core_type<tc>, window_params = [{transform_indices = @transform_0, window_bounds = array<i64: 32, 2>}, {transform_indices = @transform_1, window_bounds = array<i64: 32, 9>}, {pipeline_mode = #tpu.pipeline_mode<synchronous>, transform_indices = @transform_2, window_bounds = array<i64: 2, 128>}, {pipeline_mode = #tpu.pipeline_mode<synchronous>, transform_indices = @transform_3, window_bounds = array<i64: 9, 128>}, {pipeline_mode = #tpu.pipeline_mode<synchronous>, transform_indices = @transform_4, window_bounds = array<i64: 1, 128>}, {pipeline_mode = #tpu.pipeline_mode<synchronous>, transform_indices = @transform_5, window_bounds = array<i64: 128, 128>}, {pipeline_mode = #tpu.pipeline_mode<synchronous>, transform_indices = @transform_6, window_bounds = array<i64: 1, 128>}, {pipeline_mode = #tpu.pipeline_mode<synchronous>, transform_indices = @transform_7, window_bounds = array<i64: 1, 128>}, {pipeline_mode = #tpu.pipeline_mode<synchronous>, transform_indices = @transform_8, window_bounds = array<i64: 1, 128>}, {transform_indices = @transform_9, window_bounds = array<i64: 32, 128>}]} {
    %c0 = arith.constant 0 : index
    %c0_0 = arith.constant 0 : index
    %0 = vector.load %arg1[%c0, %c0_0] : memref<32x2xf32, #tpu.memory_space<vmem>>, vector<32x2xf32>
    %c0_1 = arith.constant 0 : index
    %c0_2 = arith.constant 0 : index
    %1 = vector.load %arg2[%c0_1, %c0_2] : memref<32x9xf32, #tpu.memory_space<vmem>>, vector<32x9xf32>
    %c0_3 = arith.constant 0 : index
    %c0_4 = arith.constant 0 : index
    %2 = vector.load %arg5[%c0_3, %c0_4] : memref<1x128xf32, #tpu.memory_space<vmem>>, vector<1x128xf32>
    %3 = vector.extract_strided_slice %0 {offsets = [0, 0], sizes = [32, 1], strides = [1, 1]} : vector<32x2xf32> to vector<32x1xf32>
    %c0_5 = arith.constant 0 : index
    %c0_6 = arith.constant 0 : index
    %4 = vector.load %arg3[%c0_5, %c0_6] : memref<2x128xf32, #tpu.memory_space<vmem>>, vector<1x128xf32>
    %5 = vector.broadcast %3 : vector<32x1xf32> to vector<32x128xf32>
    %6 = vector.broadcast %4 : vector<1x128xf32> to vector<32x128xf32>
    %7 = arith.mulf %5, %6 : vector<32x128xf32>
    %8 = vector.broadcast %2 : vector<1x128xf32> to vector<32x128xf32>
    %9 = arith.addf %8, %7 : vector<32x128xf32>
    %10 = vector.extract_strided_slice %0 {offsets = [0, 1], sizes = [32, 1], strides = [1, 1]} : vector<32x2xf32> to vector<32x1xf32>
    %c1 = arith.constant 1 : index
    %c0_7 = arith.constant 0 : index
    %11 = vector.load %arg3[%c1, %c0_7] : memref<2x128xf32, #tpu.memory_space<vmem>>, vector<1x128xf32>
    %12 = vector.broadcast %10 : vector<32x1xf32> to vector<32x128xf32>
    %13 = vector.broadcast %11 : vector<1x128xf32> to vector<32x128xf32>
    %14 = arith.mulf %12, %13 : vector<32x128xf32>
    %15 = arith.addf %9, %14 : vector<32x128xf32>
    %16 = vector.extract_strided_slice %1 {offsets = [0, 0], sizes = [32, 1], strides = [1, 1]} : vector<32x9xf32> to vector<32x1xf32>
    %c0_8 = arith.constant 0 : index
    %c0_9 = arith.constant 0 : index
    %17 = vector.load %arg4[%c0_8, %c0_9] : memref<9x128xf32, #tpu.memory_space<vmem>>, vector<1x128xf32>
    %18 = vector.broadcast %16 : vector<32x1xf32> to vector<32x128xf32>
    %19 = vector.broadcast %17 : vector<1x128xf32> to vector<32x128xf32>
    %20 = arith.mulf %18, %19 : vector<32x128xf32>
    %21 = arith.addf %15, %20 : vector<32x128xf32>
    %22 = vector.extract_strided_slice %1 {offsets = [0, 1], sizes = [32, 1], strides = [1, 1]} : vector<32x9xf32> to vector<32x1xf32>
    %c1_10 = arith.constant 1 : index
    %c0_11 = arith.constant 0 : index
    %23 = vector.load %arg4[%c1_10, %c0_11] : memref<9x128xf32, #tpu.memory_space<vmem>>, vector<1x128xf32>
    %24 = vector.broadcast %22 : vector<32x1xf32> to vector<32x128xf32>
    %25 = vector.broadcast %23 : vector<1x128xf32> to vector<32x128xf32>
    %26 = arith.mulf %24, %25 : vector<32x128xf32>
    %27 = arith.addf %21, %26 : vector<32x128xf32>
    %28 = vector.extract_strided_slice %1 {offsets = [0, 2], sizes = [32, 1], strides = [1, 1]} : vector<32x9xf32> to vector<32x1xf32>
    %c2 = arith.constant 2 : index
    %c0_12 = arith.constant 0 : index
    %29 = vector.load %arg4[%c2, %c0_12] : memref<9x128xf32, #tpu.memory_space<vmem>>, vector<1x128xf32>
    %30 = vector.broadcast %28 : vector<32x1xf32> to vector<32x128xf32>
    %31 = vector.broadcast %29 : vector<1x128xf32> to vector<32x128xf32>
    %32 = arith.mulf %30, %31 : vector<32x128xf32>
    %33 = arith.addf %27, %32 : vector<32x128xf32>
    %34 = vector.extract_strided_slice %1 {offsets = [0, 3], sizes = [32, 1], strides = [1, 1]} : vector<32x9xf32> to vector<32x1xf32>
    %c3 = arith.constant 3 : index
    %c0_13 = arith.constant 0 : index
    %35 = vector.load %arg4[%c3, %c0_13] : memref<9x128xf32, #tpu.memory_space<vmem>>, vector<1x128xf32>
    %36 = vector.broadcast %34 : vector<32x1xf32> to vector<32x128xf32>
    %37 = vector.broadcast %35 : vector<1x128xf32> to vector<32x128xf32>
    %38 = arith.mulf %36, %37 : vector<32x128xf32>
    %39 = arith.addf %33, %38 : vector<32x128xf32>
    %40 = vector.extract_strided_slice %1 {offsets = [0, 4], sizes = [32, 1], strides = [1, 1]} : vector<32x9xf32> to vector<32x1xf32>
    %c4 = arith.constant 4 : index
    %c0_14 = arith.constant 0 : index
    %41 = vector.load %arg4[%c4, %c0_14] : memref<9x128xf32, #tpu.memory_space<vmem>>, vector<1x128xf32>
    %42 = vector.broadcast %40 : vector<32x1xf32> to vector<32x128xf32>
    %43 = vector.broadcast %41 : vector<1x128xf32> to vector<32x128xf32>
    %44 = arith.mulf %42, %43 : vector<32x128xf32>
    %45 = arith.addf %39, %44 : vector<32x128xf32>
    %46 = vector.extract_strided_slice %1 {offsets = [0, 5], sizes = [32, 1], strides = [1, 1]} : vector<32x9xf32> to vector<32x1xf32>
    %c5 = arith.constant 5 : index
    %c0_15 = arith.constant 0 : index
    %47 = vector.load %arg4[%c5, %c0_15] : memref<9x128xf32, #tpu.memory_space<vmem>>, vector<1x128xf32>
    %48 = vector.broadcast %46 : vector<32x1xf32> to vector<32x128xf32>
    %49 = vector.broadcast %47 : vector<1x128xf32> to vector<32x128xf32>
    %50 = arith.mulf %48, %49 : vector<32x128xf32>
    %51 = arith.addf %45, %50 : vector<32x128xf32>
    %52 = vector.extract_strided_slice %1 {offsets = [0, 6], sizes = [32, 1], strides = [1, 1]} : vector<32x9xf32> to vector<32x1xf32>
    %c6 = arith.constant 6 : index
    %c0_16 = arith.constant 0 : index
    %53 = vector.load %arg4[%c6, %c0_16] : memref<9x128xf32, #tpu.memory_space<vmem>>, vector<1x128xf32>
    %54 = vector.broadcast %52 : vector<32x1xf32> to vector<32x128xf32>
    %55 = vector.broadcast %53 : vector<1x128xf32> to vector<32x128xf32>
    %56 = arith.mulf %54, %55 : vector<32x128xf32>
    %57 = arith.addf %51, %56 : vector<32x128xf32>
    %58 = vector.extract_strided_slice %1 {offsets = [0, 7], sizes = [32, 1], strides = [1, 1]} : vector<32x9xf32> to vector<32x1xf32>
    %c7 = arith.constant 7 : index
    %c0_17 = arith.constant 0 : index
    %59 = vector.load %arg4[%c7, %c0_17] : memref<9x128xf32, #tpu.memory_space<vmem>>, vector<1x128xf32>
    %60 = vector.broadcast %58 : vector<32x1xf32> to vector<32x128xf32>
    %61 = vector.broadcast %59 : vector<1x128xf32> to vector<32x128xf32>
    %62 = arith.mulf %60, %61 : vector<32x128xf32>
    %63 = arith.addf %57, %62 : vector<32x128xf32>
    %64 = vector.extract_strided_slice %1 {offsets = [0, 8], sizes = [32, 1], strides = [1, 1]} : vector<32x9xf32> to vector<32x1xf32>
    %c8 = arith.constant 8 : index
    %c0_18 = arith.constant 0 : index
    %65 = vector.load %arg4[%c8, %c0_18] : memref<9x128xf32, #tpu.memory_space<vmem>>, vector<1x128xf32>
    %66 = vector.broadcast %64 : vector<32x1xf32> to vector<32x128xf32>
    %67 = vector.broadcast %65 : vector<1x128xf32> to vector<32x128xf32>
    %68 = arith.mulf %66, %67 : vector<32x128xf32>
    %69 = arith.addf %63, %68 : vector<32x128xf32>
    %cst = arith.constant 0.000000e+00 : f32
    %70 = vector.broadcast %cst : f32 to vector<32x128xf32>
    %71 = arith.maximumf %69, %70 : vector<32x128xf32>
    %72 = arith.truncf %71 : vector<32x128xf32> to vector<32x128xbf16>
    %c0_19 = arith.constant 0 : index
    %c0_20 = arith.constant 0 : index
    %73 = vector.load %arg6[%c0_19, %c0_20] : memref<128x128xbf16, #tpu.memory_space<vmem>>, vector<128x128xbf16>
    %cst_21 = arith.constant dense<0.000000e+00> : vector<32x128xf32>
    %74 = tpu.matmul %72, %73, %cst_21 {dimension_numbers = #tpu.dot_dimension_numbers<[1], [0], [0], [1], [0, 0, 1, 1], [], []>} : vector<32x128xbf16>, vector<128x128xbf16>, vector<32x128xf32> -> vector<32x128xf32>
    %c0_22 = arith.constant 0 : index
    %c0_23 = arith.constant 0 : index
    %75 = vector.load %arg7[%c0_22, %c0_23] : memref<1x128xf32, #tpu.memory_space<vmem>>, vector<1x128xf32>
    %76 = vector.broadcast %75 : vector<1x128xf32> to vector<32x128xf32>
    %77 = arith.addf %74, %76 : vector<32x128xf32>
    %c0_24 = arith.constant 0 : index
    %c0_25 = arith.constant 0 : index
    %78 = vector.load %arg8[%c0_24, %c0_25] : memref<1x128xf32, #tpu.memory_space<vmem>>, vector<1x128xf32>
    %c0_26 = arith.constant 0 : index
    %c0_27 = arith.constant 0 : index
    %79 = vector.load %arg9[%c0_26, %c0_27] : memref<1x128xf32, #tpu.memory_space<vmem>>, vector<1x128xf32>
    %cst_28 = arith.constant dense<0.000000e+00> : vector<32xf32>
    %80 = vector.multi_reduction <add>, %77, %cst_28 [1] : vector<32x128xf32> to vector<32xf32>
    %81 = vector.shape_cast %80 : vector<32xf32> to vector<32x1xf32>
    %cst_29 = arith.constant 1.280000e+02 : f32
    %82 = vector.broadcast %cst_29 : f32 to vector<32x1xf32>
    %83 = arith.divf %81, %82 : vector<32x1xf32>
    %84 = arith.mulf %77, %77 : vector<32x128xf32>
    %cst_30 = arith.constant dense<0.000000e+00> : vector<32xf32>
    %85 = vector.multi_reduction <add>, %84, %cst_30 [1] : vector<32x128xf32> to vector<32xf32>
    %86 = vector.shape_cast %85 : vector<32xf32> to vector<32x1xf32>
    %cst_31 = arith.constant 1.280000e+02 : f32
    %87 = vector.broadcast %cst_31 : f32 to vector<32x1xf32>
    %88 = arith.divf %86, %87 : vector<32x1xf32>
    %89 = arith.mulf %83, %83 : vector<32x1xf32>
    %90 = arith.subf %88, %89 : vector<32x1xf32>
    %91 = vector.broadcast %83 : vector<32x1xf32> to vector<32x128xf32>
    %92 = arith.subf %77, %91 : vector<32x128xf32>
    %cst_32 = arith.constant 9.99999974E-6 : f32
    %93 = vector.broadcast %cst_32 : f32 to vector<32x1xf32>
    %94 = arith.addf %90, %93 : vector<32x1xf32>
    %95 = math.rsqrt %94 : vector<32x1xf32>
    %96 = vector.broadcast %95 : vector<32x1xf32> to vector<32x128xf32>
    %97 = arith.mulf %92, %96 : vector<32x128xf32>
    %98 = vector.broadcast %78 : vector<1x128xf32> to vector<32x128xf32>
    %99 = arith.mulf %97, %98 : vector<32x128xf32>
    %100 = vector.broadcast %79 : vector<1x128xf32> to vector<32x128xf32>
    %101 = arith.addf %99, %100 : vector<32x128xf32>
    %102 = arith.truncf %101 : vector<32x128xf32> to vector<32x128xbf16>
    %c0_33 = arith.constant 0 : index
    %c0_34 = arith.constant 0 : index
    %103 = vector.load %arg10[%c0_33, %c0_34] : memref<32x128xbf16, #tpu.memory_space<vmem>>, vector<32x128xbf16>
    tpu.vector_store %arg10[%c0_33, %c0_34], %102 {strides = array<i32>} : memref<32x128xbf16, #tpu.memory_space<vmem>>, vector<32x128xbf16>,
    return
  }
  func.func @transform_0(%arg0: i32) -> (i32, i32) {
    %c0_i32 = arith.constant 0 : i32
    %c0_i32_0 = arith.constant 0 : i32
    return %arg0, %c0_i32 : i32, i32
  }
  func.func @transform_1(%arg0: i32) -> (i32, i32) {
    %c0_i32 = arith.constant 0 : i32
    %c0_i32_0 = arith.constant 0 : i32
    return %arg0, %c0_i32 : i32, i32
  }
  func.func @transform_2(%arg0: i32) -> (i32, i32) {
    %c0_i32 = arith.constant 0 : i32
    %c0_i32_0 = arith.constant 0 : i32
    %c0_i32_1 = arith.constant 0 : i32
    return %c0_i32, %c0_i32_0 : i32, i32
  }
  func.func @transform_3(%arg0: i32) -> (i32, i32) {
    %c0_i32 = arith.constant 0 : i32
    %c0_i32_0 = arith.constant 0 : i32
    %c0_i32_1 = arith.constant 0 : i32
    return %c0_i32, %c0_i32_0 : i32, i32
  }
  func.func @transform_4(%arg0: i32) -> (i32, i32) {
    %c0_i32 = arith.constant 0 : i32
    %c0_i32_0 = arith.constant 0 : i32
    %c0_i32_1 = arith.constant 0 : i32
    return %c0_i32, %c0_i32_0 : i32, i32
  }
  func.func @transform_5(%arg0: i32) -> (i32, i32) {
    %c0_i32 = arith.constant 0 : i32
    %c0_i32_0 = arith.constant 0 : i32
    %c0_i32_1 = arith.constant 0 : i32
    return %c0_i32, %c0_i32_0 : i32, i32
  }
  func.func @transform_6(%arg0: i32) -> (i32, i32) {
    %c0_i32 = arith.constant 0 : i32
    %c0_i32_0 = arith.constant 0 : i32
    %c0_i32_1 = arith.constant 0 : i32
    return %c0_i32, %c0_i32_0 : i32, i32
  }
  func.func @transform_7(%arg0: i32) -> (i32, i32) {
    %c0_i32 = arith.constant 0 : i32
    %c0_i32_0 = arith.constant 0 : i32
    %c0_i32_1 = arith.constant 0 : i32
    return %c0_i32, %c0_i32_0 : i32, i32
  }
  func.func @transform_8(%arg0: i32) -> (i32, i32) {
    %c0_i32 = arith.constant 0 : i32
    %c0_i32_0 = arith.constant 0 : i32
    %c0_i32_1 = arith.constant 0 : i32
    return %c0_i32, %c0_i32_0 : i32, i32
  }
  func.func @transform_9(%arg0: i32) -> (i32, i32) {
    %c0_i32 = arith.constant 0 : i32
    %c0_i32_0 = arith.constant 0 : i32
    return %arg0, %c0_i32 : i32, i32
  }
}

</mosaic_0001>

<llo_original>
// kernel: encoder_forward.3
$region0: #{encoder_forward.3}
  #allocation0 [shape = 'u32[]', space=smem, size = 0x4, offset = 0x4, fixed_abs, tag = 'smem constant byte address 0x4 - core index']
  #allocation1 [shape = 'u32[144,128]{1,0:T(1,128)}', space=vmem, size = 0x12000, scoped, tag = 'internal scratch']
  %s0 = inlined_call_operand.vmem [shape: f32[52,2], index: 0, kind: input, shape index: {}]
  %s1 = inlined_call_operand.vmem [shape: f32[52,2], index: 1, kind: input, shape index: {}]
  %s2 = inlined_call_operand.vmem [shape: f32[3,128], index: 2, kind: input, shape index: {}]
  %s3 = inlined_call_operand.vmem [shape: f32[1,128], index: 3, kind: input, shape index: {}]
  %s4 = inlined_call_operand.vmem [shape: bf16[128,128], index: 4, kind: input, shape index: {}]
  %s5 = inlined_call_operand.vmem [shape: f32[1,128], index: 5, kind: input, shape index: {}]
  %s6 = inlined_call_operand.vmem [shape: f32[1,128], index: 6, kind: input, shape index: {}]
  %s7 = inlined_call_operand.vmem [shape: f32[1,128], index: 7, kind: input, shape index: {}]
  %s8 = inlined_call_operand.vmem [shape: bf16[52,128], index: 8, kind: output, shape index: {}]
  %s9 = sld [smem:[#allocation0]]
  $region109: #{encoder_forward.3} parent=0
    _
  %s11 = ssub.s32 1, %s9
  %s12 = scalar_select 0, %s11, %s9
  $region1: #{encoder_forward.3} parent=0
    #allocation2 [shape = 'u8[16384]{0}', space=vmem, size = 0x4000, scoped, tag = 'output window, operand 0']
    loop: start=0, step=1, limit=4
    $region2: #{encoder_forward.3} parent=1 // loop_pre_header
      _
    $region3: #{encoder_forward.3} parent=1 // loop_header
      %s14 = sphi 0, %s18
      %p15 = scmp.ge.s32.totalorder %s14, 4
      %s24 = sphi 0, %s26
      %s27 = sphi 0, %s24
      %s28 = sphi 0, %s27
      %s44 = sphi 0, %s28
      %s50 = sphi 0, %s52
      %s53 = sphi 0, %s50
      %s54 = sphi 0, %s53
      %s70 = sphi 0, %s54
      %s74 = sphi 0, %s74
      %s76 = sphi 0, %s74
      %s77 = sphi 0, %s76
      %s91 = sphi 0, %s77
      %s95 = sphi 0, %s95
      %s97 = sphi 0, %s95
      %s98 = sphi 0, %s97
      %s112 = sphi 0, %s98
      %s116 = sphi 0, %s116
      %s118 = sphi 0, %s116
      %s119 = sphi 0, %s118
      %s133 = sphi 0, %s119
      %s137 = sphi 0, %s137
      %s139 = sphi 0, %s137
      %s140 = sphi 0, %s139
      %s154 = sphi 0, %s140
      %s158 = sphi 0, %s158
      %s160 = sphi 0, %s158
      %s161 = sphi 0, %s160
      %s175 = sphi 0, %s161
      %s179 = sphi 0, %s179
      %s181 = sphi 0, %s179
      %s182 = sphi 0, %s181
      %s196 = sphi 0, %s182
      %s202 = sphi 0, %s204
      %s205 = sphi 0, %s202
      %s206 = sphi 0, %s205
      %s222 = sphi 0, %s206
    $region4: #{encoder_forward.3} parent=1 // loop_header_branch
      %17 = sbr.rel (%p15) target = $region8
    $region5: #{encoder_forward.3} parent=1 // loop_body
      %s19 = ssub.s32 %s14, 1
      %s20 = ssub.s32 %s14, 2
      %s21 = sadd.s32 %s14, 1
      %s22 = ssub.s32 %s14, %s21
      %p23 = scmp.eq.s32.totalorder %s22, 0
      %s25 = sadd.s32 %s24, 1
      %s26 = scalar_select %p23, %s24, %s25
      %p29 = pneg %p23
      %p30 = scmp.eq.s32.totalorder %s14, 1
      %p31 = por %p29, %p30
      %p32 = scmp.ne.s32.totalorder %s24, %s27
      %p33 = scmp.eq.s32.totalorder %s14, 0
      %p34 = por %p32, %p33
      %p35 = scmp.ne.s32.totalorder %s24, %s27
      %p36 = scmp.eq.s32.totalorder %s19, 1
      %p37 = por %p35, %p36
      %p38 = scmp.ne.s32.totalorder %s27, %s28
      %p39 = scmp.eq.s32.totalorder %s19, 0
      %p40 = por %p38, %p39
      %p41 = scmp.ne.s32.totalorder %s27, %s28
      %p42 = scmp.eq.s32.totalorder %s20, 1
      %p43 = por %p41, %p42
      %p45 = scmp.ne.s32.totalorder %s28, %s44
      %p46 = scmp.eq.s32.totalorder %s20, 0
      %p47 = por %p45, %p46
      %s48 = ssub.s32 %s14, %s21
      %p49 = scmp.eq.s32.totalorder %s48, 0
      %s51 = sadd.s32 %s50, 1
      %s52 = scalar_select %p49, %s50, %s51
      %p55 = pneg %p49
      %p56 = scmp.eq.s32.totalorder %s14, 1
      %p57 = por %p55, %p56
      %p58 = scmp.ne.s32.totalorder %s50, %s53
      %p59 = scmp.eq.s32.totalorder %s14, 0
      %p60 = por %p58, %p59
      %p61 = scmp.ne.s32.totalorder %s50, %s53
      %p62 = scmp.eq.s32.totalorder %s19, 1
      %p63 = por %p61, %p62
      %p64 = scmp.ne.s32.totalorder %s53, %s54
      %p65 = scmp.eq.s32.totalorder %s19, 0
      %p66 = por %p64, %p65
      %p67 = scmp.ne.s32.totalorder %s53, %s54
      %p68 = scmp.eq.s32.totalorder %s20, 1
      %p69 = por %p67, %p68
      %p71 = scmp.ne.s32.totalorder %s54, %s70
      %p72 = scmp.eq.s32.totalorder %s20, 0
      %p73 = por %p71, %p72
      %s75 = sadd.s32 %s74, 1
      %p78 = scmp.eq.s32.totalorder %s14, 1
      %p79 = scmp.ne.s32.totalorder %s74, %s76
      %p80 = scmp.eq.s32.totalorder %s14, 0
      %p81 = por %p79, %p80
      %p82 = scmp.ne.s32.totalorder %s74, %s76
      %p83 = scmp.eq.s32.totalorder %s19, 1
      %p84 = por %p82, %p83
      %p85 = scmp.ne.s32.totalorder %s76, %s77
      %p86 = scmp.eq.s32.totalorder %s19, 0
      %p87 = por %p85, %p86
      %p88 = scmp.ne.s32.totalorder %s76, %s77
      %p89 = scmp.eq.s32.totalorder %s20, 1
      %p90 = por %p88, %p89
      %p92 = scmp.ne.s32.totalorder %s77, %s91
      %p93 = scmp.eq.s32.totalorder %s20, 0
      %p94 = por %p92, %p93
      %s96 = sadd.s32 %s95, 1
      %p99 = scmp.eq.s32.totalorder %s14, 1
      %p100 = scmp.ne.s32.totalorder %s95, %s97
      %p101 = scmp.eq.s32.totalorder %s14, 0
      %p102 = por %p100, %p101
      %p103 = scmp.ne.s32.totalorder %s95, %s97
      %p104 = scmp.eq.s32.totalorder %s19, 1
      %p105 = por %p103, %p104
      %p106 = scmp.ne.s32.totalorder %s97, %s98
      %p107 = scmp.eq.s32.totalorder %s19, 0
      %p108 = por %p106, %p107
      %p109 = scmp.ne.s32.totalorder %s97, %s98
      %p110 = scmp.eq.s32.totalorder %s20, 1
      %p111 = por %p109, %p110
      %p113 = scmp.ne.s32.totalorder %s98, %s112
      %p114 = scmp.eq.s32.totalorder %s20, 0
      %p115 = por %p113, %p114
      %s117 = sadd.s32 %s116, 1
      %p120 = scmp.eq.s32.totalorder %s14, 1
      %p121 = scmp.ne.s32.totalorder %s116, %s118
      %p122 = scmp.eq.s32.totalorder %s14, 0
      %p123 = por %p121, %p122
      %p124 = scmp.ne.s32.totalorder %s116, %s118
      %p125 = scmp.eq.s32.totalorder %s19, 1
      %p126 = por %p124, %p125
      %p127 = scmp.ne.s32.totalorder %s118, %s119
      %p128 = scmp.eq.s32.totalorder %s19, 0
      %p129 = por %p127, %p128
      %p130 = scmp.ne.s32.totalorder %s118, %s119
      %p131 = scmp.eq.s32.totalorder %s20, 1
      %p132 = por %p130, %p131
      %p134 = scmp.ne.s32.totalorder %s119, %s133
      %p135 = scmp.eq.s32.totalorder %s20, 0
      %p136 = por %p134, %p135
      %s138 = sadd.s32 %s137, 1
      %p141 = scmp.eq.s32.totalorder %s14, 1
      %p142 = scmp.ne.s32.totalorder %s137, %s139
      %p143 = scmp.eq.s32.totalorder %s14, 0
      %p144 = por %p142, %p143
      %p145 = scmp.ne.s32.totalorder %s137, %s139
      %p146 = scmp.eq.s32.totalorder %s19, 1
      %p147 = por %p145, %p146
      %p148 = scmp.ne.s32.totalorder %s139, %s140
      %p149 = scmp.eq.s32.totalorder %s19, 0
      %p150 = por %p148, %p149
      %p151 = scmp.ne.s32.totalorder %s139, %s140
      %p152 = scmp.eq.s32.totalorder %s20, 1
      %p153 = por %p151, %p152
      %p155 = scmp.ne.s32.totalorder %s140, %s154
      %p156 = scmp.eq.s32.totalorder %s20, 0
      %p157 = por %p155, %p156
      %s159 = sadd.s32 %s158, 1
      %p162 = scmp.eq.s32.totalorder %s14, 1
      %p163 = scmp.ne.s32.totalorder %s158, %s160
      %p164 = scmp.eq.s32.totalorder %s14, 0
      %p165 = por %p163, %p164
      %p166 = scmp.ne.s32.totalorder %s158, %s160
      %p167 = scmp.eq.s32.totalorder %s19, 1
      %p168 = por %p166, %p167
      %p169 = scmp.ne.s32.totalorder %s160, %s161
      %p170 = scmp.eq.s32.totalorder %s19, 0
      %p171 = por %p169, %p170
      %p172 = scmp.ne.s32.totalorder %s160, %s161
      %p173 = scmp.eq.s32.totalorder %s20, 1
      %p174 = por %p172, %p173
      %p176 = scmp.ne.s32.totalorder %s161, %s175
      %p177 = scmp.eq.s32.totalorder %s20, 0
      %p178 = por %p176, %p177
      %s180 = sadd.s32 %s179, 1
      %p183 = scmp.eq.s32.totalorder %s14, 1
      %p184 = scmp.ne.s32.totalorder %s179, %s181
      %p185 = scmp.eq.s32.totalorder %s14, 0
      %p186 = por %p184, %p185
      %p187 = scmp.ne.s32.totalorder %s179, %s181
      %p188 = scmp.eq.s32.totalorder %s19, 1
      %p189 = por %p187, %p188
      %p190 = scmp.ne.s32.totalorder %s181, %s182
      %p191 = scmp.eq.s32.totalorder %s19, 0
      %p192 = por %p190, %p191
      %p193 = scmp.ne.s32.totalorder %s181, %s182
      %p194 = scmp.eq.s32.totalorder %s20, 1
      %p195 = por %p193, %p194
      %p197 = scmp.ne.s32.totalorder %s182, %s196
      %p198 = scmp.eq.s32.totalorder %s20, 0
      %p199 = por %p197, %p198
      %s200 = ssub.s32 %s14, %s21
      %p201 = scmp.eq.s32.totalorder %s200, 0
      %s203 = sadd.s32 %s202, 1
      %s204 = scalar_select %p201, %s202, %s203
      %p207 = pneg %p201
      %p208 = scmp.eq.s32.totalorder %s14, 1
      %p209 = por %p207, %p208
      %p210 = scmp.ne.s32.totalorder %s202, %s205
      %p211 = scmp.eq.s32.totalorder %s14, 0
      %p212 = por %p210, %p211
      %p213 = scmp.ne.s32.totalorder %s202, %s205
      %p214 = scmp.eq.s32.totalorder %s19, 1
      %p215 = por %p213, %p214
      %p216 = scmp.ne.s32.totalorder %s205, %s206
      %p217 = scmp.eq.s32.totalorder %s19, 0
      %p218 = por %p216, %p217
      %p219 = scmp.ne.s32.totalorder %s205, %s206
      %p220 = scmp.eq.s32.totalorder %s20, 1
      %p221 = por %p219, %p220
      %p223 = scmp.ne.s32.totalorder %s206, %s222
      %p224 = scmp.eq.s32.totalorder %s20, 0
      %p225 = por %p223, %p224
      %p226 = scmp.le.s32.totalorder 1, %s14
      %p227 = scmp.lt.s32.totalorder %s14, 3
      %p228 = pnand %p226, %p227
      %p229 = pneg %p228
      // Predicated region
      $region9: #{encoder_forward.3} parent=5 // pred_check
        _
      $region10: #{encoder_forward.3} parent=5 // pred_check_branch
        %231 = sbr.rel (%p228) target = $region12
      $region11: #{encoder_forward.3} parent=5 // pred_region
        %s232 = ssub.s32 %s14, 1
        // Predicated region
        $region13: #{encoder_forward.3} parent=11 // pred_check
          %p233 = pneg %p87
        $region14: #{encoder_forward.3} parent=11 // pred_check_branch
          %235 = sbr.rel (%p233) target = $region16
        $region15: #{encoder_forward.3} parent=11 // pred_region
          _
        $region16: #{encoder_forward.3} parent=11 // pred_fallthru
          _
        // Predicated region
        $region17: #{encoder_forward.3} parent=11 // pred_check
          %p236 = pneg %p108
        $region18: #{encoder_forward.3} parent=11 // pred_check_branch
          %238 = sbr.rel (%p236) target = $region20
        $region19: #{encoder_forward.3} parent=11 // pred_region
          _
        $region20: #{encoder_forward.3} parent=11 // pred_fallthru
          _
        // Predicated region
        $region21: #{encoder_forward.3} parent=11 // pred_check
          %p239 = pneg %p129
        $region22: #{encoder_forward.3} parent=11 // pred_check_branch
          %241 = sbr.rel (%p239) target = $region24
        $region23: #{encoder_forward.3} parent=11 // pred_region
          _
        $region24: #{encoder_forward.3} parent=11 // pred_fallthru
          _
        // Predicated region
        $region25: #{encoder_forward.3} parent=11 // pred_check
          %p242 = pneg %p150
        $region26: #{encoder_forward.3} parent=11 // pred_check_branch
          %244 = sbr.rel (%p242) target = $region28
        $region27: #{encoder_forward.3} parent=11 // pred_region
          _
        $region28: #{encoder_forward.3} parent=11 // pred_fallthru
          _
        // Predicated region
        $region29: #{encoder_forward.3} parent=11 // pred_check
          %p245 = pneg %p171
        $region30: #{encoder_forward.3} parent=11 // pred_check_branch
          %247 = sbr.rel (%p245) target = $region32
        $region31: #{encoder_forward.3} parent=11 // pred_region
          _
        $region32: #{encoder_forward.3} parent=11 // pred_fallthru
          _
        // Predicated region
        $region33: #{encoder_forward.3} parent=11 // pred_check
          %p248 = pneg %p192
        $region34: #{encoder_forward.3} parent=11 // pred_check_branch
          %250 = sbr.rel (%p248) target = $region36
        $region35: #{encoder_forward.3} parent=11 // pred_region
          _
        $region36: #{encoder_forward.3} parent=11 // pred_fallthru
          _
      $region12: #{encoder_forward.3} parent=5 // pred_fallthru
        _
      %p251 = scmp.lt.s32.totalorder %s14, 2
      // Predicated region
      $region37: #{encoder_forward.3} parent=5 // pred_check
        %p252 = pneg %p251
      $region38: #{encoder_forward.3} parent=5 // pred_check_branch
        %254 = sbr.rel (%p252) target = $region40
      $region39: #{encoder_forward.3} parent=5 // pred_region
        // Predicated region
        $region41: #{encoder_forward.3} parent=39 // pred_check
          %p255 = pneg %p34
        $region42: #{encoder_forward.3} parent=39 // pred_check_branch
          %257 = sbr.rel (%p255) target = $region44
        $region43: #{encoder_forward.3} parent=39 // pred_region
          %s258 = smul.u32 4, %s14
          %s259 = ssub.s32 7, %s258
          %p260 = scmp.lt.s32.totalorder %s259, 4
          %s261 = scalar_select %p260, %s259, 4
          %s262 = smul.u32 128, %s261
          %p263 = scmp.lt.s32.totalorder %s258, 6
          %s264 = scalar_select %p263, %s258, 6
          %s265 = smul.addr %s264, 8
          %s266 = scalar_lea.vmem %s0, %s265
          %s267 = smul.u32 4, %s14
          %s268 = ssub.s32 7, %s267
          %p269 = scmp.lt.s32.totalorder %s268, 4
          %s270 = scalar_select %p269, %s268, 4
          %s271 = smul.u32 128, %s270
        $region44: #{encoder_forward.3} parent=39 // pred_fallthru
          _
        // Predicated region
        $region45: #{encoder_forward.3} parent=39 // pred_check
          %p272 = pneg %p60
        $region46: #{encoder_forward.3} parent=39 // pred_check_branch
          %274 = sbr.rel (%p272) target = $region48
        $region47: #{encoder_forward.3} parent=39 // pred_region
          %s275 = smul.u32 4, %s14
          %s276 = ssub.s32 7, %s275
          %p277 = scmp.lt.s32.totalorder %s276, 4
          %s278 = scalar_select %p277, %s276, 4
          %s279 = smul.u32 128, %s278
          %p280 = scmp.lt.s32.totalorder %s275, 6
          %s281 = scalar_select %p280, %s275, 6
          %s282 = smul.addr %s281, 8
          %s283 = scalar_lea.vmem %s1, %s282
          %s284 = smul.u32 4, %s14
          %s285 = ssub.s32 7, %s284
          %p286 = scmp.lt.s32.totalorder %s285, 4
          %s287 = scalar_select %p286, %s285, 4
          %s288 = smul.u32 128, %s287
        $region48: #{encoder_forward.3} parent=39 // pred_fallthru
          _
      $region40: #{encoder_forward.3} parent=5 // pred_fallthru
        _
      %p289 = scmp.le.s32.totalorder 1, %s14
      %p290 = scmp.lt.s32.totalorder %s14, 3
      %p291 = pnand %p289, %p290
      %p292 = pneg %p291
      // Predicated region
      $region49: #{encoder_forward.3} parent=5 // pred_check
        _
      $region50: #{encoder_forward.3} parent=5 // pred_check_branch
        %294 = sbr.rel (%p291) target = $region52
      $region51: #{encoder_forward.3} parent=5 // pred_region
        %s295 = ssub.s32 %s14, 1
        %s296 = smul.u32 4, %s19
        %s297 = ssub.s32 7, %s296
        %p298 = scmp.lt.s32.totalorder %s297, 4
        %s299 = scalar_select %p298, %s297, 4
        %s300 = smul.u32 128, %s299
        %p301 = scmp.lt.s32.totalorder %s296, 6
        %s302 = scalar_select %p301, %s296, 6
        %s303 = smul.addr %s302, 8
        %s304 = scalar_lea.vmem %s0, %s303
        %p305 = pneg %p40
        %p306 = pneg %p37
        %s307 = smul.u32 4, %s19
        %s308 = ssub.s32 7, %s307
        %p309 = scmp.lt.s32.totalorder %s308, 4
        %s310 = scalar_select %p309, %s308, 4
        %s311 = smul.u32 128, %s310
        %p312 = scmp.lt.s32.totalorder %s307, 6
        %s313 = scalar_select %p312, %s307, 6
        %s314 = smul.addr %s313, 8
        %s315 = scalar_lea.vmem %s1, %s314
        %p316 = pneg %p66
        %p317 = pneg %p63
        %p318 = pneg %p87
        %p319 = pneg %p84
        %p320 = pneg %p108
        %p321 = pneg %p105
        %p322 = pneg %p129
        %p323 = pneg %p126
        %p324 = pneg %p150
        %p325 = pneg %p147
        %p326 = pneg %p171
        %p327 = pneg %p168
        %p328 = pneg %p192
        %p329 = pneg %p189
        %p330 = pneg %p218
        %p331 = pneg %p215
        %s332 = sand.u32 %s205, 1
        %s333 = sand.u32 %s205, 1
        %s334 = smul.addr %s333, 16
        %s335 = scalar_lea.vmem [#allocation2], %s334
        %s336 = smul.u32 4, %s19
        %s337 = ssub.s32 7, %s336
        %p338 = scmp.lt.s32.totalorder %s337, 4
        %s339 = scalar_select %p338, %s337, 4
        %s340 = smul.u32 128, %s339
        %p341 = scmp.lt.s32.totalorder %s336, 6
        %s342 = scalar_select %p341, %s336, 6
        %s343 = smul.addr %s342, 8
        %s344 = scalar_lea.vmem %s0, %s343
        %s345 = smul.u32 4, %s19
        %s346 = ssub.s32 7, %s345
        %p347 = scmp.lt.s32.totalorder %s346, 4
        %s348 = scalar_select %p347, %s346, 4
        %s349 = smul.u32 128, %s348
        %s350 = smul.u32 4, %s19
        %s351 = ssub.s32 7, %s350
        %p352 = scmp.lt.s32.totalorder %s351, 4
        %s353 = scalar_select %p352, %s351, 4
        %s354 = smul.u32 128, %s353
        %p355 = scmp.lt.s32.totalorder %s350, 6
        %s356 = scalar_select %p355, %s350, 6
        %s357 = smul.addr %s356, 8
        %s358 = scalar_lea.vmem %s1, %s357
        %s359 = smul.u32 4, %s19
        %s360 = ssub.s32 7, %s359
        %p361 = scmp.lt.s32.totalorder %s360, 4
        %s362 = scalar_select %p361, %s360, 4
        %s363 = smul.u32 128, %s362
        %s364 = smul.u32 4, %s19
        %s365 = ssub.s32 7, %s364
        %p366 = scmp.lt.s32.totalorder %s365, 4
        %s367 = scalar_select %p366, %s365, 4
        %s368 = smul.u32 64, %s367
        %v370 = vld [vmem:[%s344] sm:$0xff]
        %v371 = vld [vmem:[%s344 + $0x8] sm:$0xff]
        %v372 = vld [vmem:[%s344 + $0x10] sm:$0xff]
        %v373 = vld [vmem:[%s344 + $0x18] sm:$0xff]
        %v374 = vld [vmem:[%s358] sm:$0xff]
        %v375 = vld [vmem:[%s358 + $0x8] sm:$0xff]
        %v376 = vld [vmem:[%s358 + $0x10] sm:$0xff]
        %v377 = vld [vmem:[%s358 + $0x18] sm:$0xff]
        %v378 = vsub.f32 %v370, %v374
        %v379 = vsub.f32 %v371, %v375
        %v380 = vsub.f32 %v372, %v376
        %v381 = vsub.f32 %v373, %v377
        %v382 = vmul.f32 %v378, %v378
        %v383 = vmul.f32 %v379, %v379
        %v384 = vmul.f32 %v380, %v380
        %v385 = vmul.f32 %v381, %v381
        %390 = vrot.lane.b32.xlu0 %v382, 127
        %v391 = vpop.permute.xlu0 %390
        %392 = vrot.lane.b32.xlu0 %v383, 127
        %v393 = vpop.permute.xlu0 %392
        %394 = vrot.lane.b32.xlu0 %v384, 127
        %v395 = vpop.permute.xlu0 %394
        %396 = vrot.lane.b32.xlu0 %v385, 127
        %v397 = vpop.permute.xlu0 %396
        %v402 = vadd.f32 %v382, %v391
        %v403 = vadd.f32 %v383, %v393
        %v404 = vadd.f32 %v384, %v395
        %v405 = vadd.f32 %v385, %v397
        %v406 = vrsqrt.pop %v402
        %v407 = vmul.f32 %v402, %v406
        %vm408 = vcmp.eq.f32.partialorder %v402, inf
        %v409 = vsel %vm408, %v402, %v407
        %vm410 = vcmp.eq.f32.partialorder %v402, 0.0
        %v411 = vand.u32 %v402, 2147483648
        %v412 = vsel %vm410, %v411, %v409
        %v413 = vrsqrt.pop %v403
        %v414 = vmul.f32 %v403, %v413
        %vm415 = vcmp.eq.f32.partialorder %v403, inf
        %v416 = vsel %vm415, %v403, %v414
        %vm417 = vcmp.eq.f32.partialorder %v403, 0.0
        %v418 = vand.u32 %v403, 2147483648
        %v419 = vsel %vm417, %v418, %v416
        %v420 = vrsqrt.pop %v404
        %v421 = vmul.f32 %v404, %v420
        %vm422 = vcmp.eq.f32.partialorder %v404, inf
        %v423 = vsel %vm422, %v404, %v421
        %vm424 = vcmp.eq.f32.partialorder %v404, 0.0
        %v425 = vand.u32 %v404, 2147483648
        %v426 = vsel %vm424, %v425, %v423
        %v427 = vrsqrt.pop %v405
        %v428 = vmul.f32 %v405, %v427
        %vm429 = vcmp.eq.f32.partialorder %v405, inf
        %v430 = vsel %vm429, %v405, %v428
        %vm431 = vcmp.eq.f32.partialorder %v405, 0.0
        %v432 = vand.u32 %v405, 2147483648
        %v433 = vsel %vm431, %v432, %v430
        %v434 = vld [vmem:[%s2] sm:$0x1]
        %436 = vset.pattern.permute.xlu0 0
        %437 = vperm.xlu0 %436, %v378
        %v438 = vpop.permute.xlu0 %437
        %441 = vset.pattern.permute.xlu0 0
        %442 = vperm.xlu0 %441, %v379
        %v443 = vpop.permute.xlu0 %442
        %446 = vset.pattern.permute.xlu0 0
        %447 = vperm.xlu0 %446, %v380
        %v448 = vpop.permute.xlu0 %447
        %451 = vset.pattern.permute.xlu0 0
        %452 = vperm.xlu0 %451, %v381
        %v453 = vpop.permute.xlu0 %452
        %v455 = vlaneseq
        %v456 = vshrl.u32 %v455, 7
        %v457 = vsub.s32 0, %v456
        %v458 = vrot.slane %v434, %v457
        %v459 = vmul.f32 %v438, %v458
        %v460 = vmul.f32 %v443, %v458
        %v461 = vmul.f32 %v448, %v458
        %v462 = vmul.f32 %v453, %v458
        %v463 = vld [vmem:[%s2 + $0x1] sm:$0x1]
        %464 = vset.pattern.permute.xlu0 1
        %465 = vperm.xlu0 %464, %v378
        %v466 = vpop.permute.xlu0 %465
        %468 = vset.pattern.permute.xlu0 1
        %469 = vperm.xlu0 %468, %v379
        %v470 = vpop.permute.xlu0 %469
        %472 = vset.pattern.permute.xlu0 1
        %473 = vperm.xlu0 %472, %v380
        %v474 = vpop.permute.xlu0 %473
        %476 = vset.pattern.permute.xlu0 1
        %477 = vperm.xlu0 %476, %v381
        %v478 = vpop.permute.xlu0 %477
        %v480 = vlaneseq
        %v481 = vshrl.u32 %v480, 7
        %v482 = vsub.s32 0, %v481
        %v483 = vrot.slane %v463, %v482
        %v484 = vmul.f32 %v466, %v483
        %v485 = vmul.f32 %v470, %v483
        %v486 = vmul.f32 %v474, %v483
        %v487 = vmul.f32 %v478, %v483
        %v488 = vadd.f32 %v459, %v484
        %v489 = vadd.f32 %v460, %v485
        %v490 = vadd.f32 %v461, %v486
        %v491 = vadd.f32 %v462, %v487
        %v492 = vld [vmem:[%s2 + $0x2] sm:$0x1]
        %494 = vset.pattern.permute.xlu0 0
        %495 = vperm.xlu0 %494, %v412
        %v496 = vpop.permute.xlu0 %495
        %499 = vset.pattern.permute.xlu0 0
        %500 = vperm.xlu0 %499, %v419
        %v501 = vpop.permute.xlu0 %500
        %504 = vset.pattern.permute.xlu0 0
        %505 = vperm.xlu0 %504, %v426
        %v506 = vpop.permute.xlu0 %505
        %509 = vset.pattern.permute.xlu0 0
        %510 = vperm.xlu0 %509, %v433
        %v511 = vpop.permute.xlu0 %510
        %v513 = vlaneseq
        %v514 = vshrl.u32 %v513, 7
        %v515 = vsub.s32 0, %v514
        %v516 = vrot.slane %v492, %v515
        %v517 = vmul.f32 %v496, %v516
        %v518 = vmul.f32 %v501, %v516
        %v519 = vmul.f32 %v506, %v516
        %v520 = vmul.f32 %v511, %v516
        %v521 = vadd.f32 %v488, %v517
        %v522 = vadd.f32 %v489, %v518
        %v523 = vadd.f32 %v490, %v519
        %v524 = vadd.f32 %v491, %v520
        %v525 = vld [vmem:[%s3] sm:$0x1]
        %v527 = vlaneseq
        %v528 = vshrl.u32 %v527, 7
        %v529 = vsub.s32 0, %v528
        %v530 = vrot.slane %v525, %v529
        %v532 = vadd.f32 %v521, %v530
        %v533 = vadd.f32 %v522, %v530
        %v534 = vadd.f32 %v523, %v530
        %v535 = vadd.f32 %v524, %v530
        %v536 = vmax.f32 %v532, 0.0
        %v537 = vmax.f32 %v533, 0.0
        %v538 = vmax.f32 %v534, 0.0
        %v539 = vmax.f32 %v535, 0.0
        %v540 = vpack.c.bf16 %v537, %v536
        %v541 = vpack.c.bf16 %v539, %v538
        %v542 = vld [vmem:[%s4] sm:$0xf]
        %v543 = vld [vmem:[%s4 + $0x4] sm:$0xf]
        %v544 = vld [vmem:[%s4 + $0x8] sm:$0xf]
        %v545 = vld [vmem:[%s4 + $0xc] sm:$0xf]
        %v546 = vld [vmem:[%s4 + $0x10] sm:$0xf]
        %v547 = vld [vmem:[%s4 + $0x14] sm:$0xf]
        %v548 = vld [vmem:[%s4 + $0x18] sm:$0xf]
        %v549 = vld [vmem:[%s4 + $0x1c] sm:$0xf]
        %v550 = vld [vmem:[%s4 + $0x20] sm:$0xf]
        %v551 = vld [vmem:[%s4 + $0x24] sm:$0xf]
        %v552 = vld [vmem:[%s4 + $0x28] sm:$0xf]
        %v553 = vld [vmem:[%s4 + $0x2c] sm:$0xf]
        %v554 = vld [vmem:[%s4 + $0x30] sm:$0xf]
        %v555 = vld [vmem:[%s4 + $0x34] sm:$0xf]
        %v556 = vld [vmem:[%s4 + $0x38] sm:$0xf]
        %v557 = vld [vmem:[%s4 + $0x3c] sm:$0xf]
        %v558 = vld [vmem:[%s5] sm:$0x1]
        %v560 = vlaneseq
        %v561 = vshrl.u32 %v560, 7
        %v562 = vsub.s32 0, %v561
        %v563 = vrot.slane %v558, %v562
        %v581 = vunpack.c.l.b16 %v542
        %v582 = vunpack.c.l.b16 %v543
        %v583 = vunpack.c.l.b16 %v544
        %v584 = vunpack.c.l.b16 %v545
        %v585 = vunpack.c.l.b16 %v546
        %v586 = vunpack.c.l.b16 %v547
        %v587 = vunpack.c.l.b16 %v548
        %v588 = vunpack.c.l.b16 %v549
        %v589 = vunpack.c.l.b16 %v550
        %v590 = vunpack.c.l.b16 %v551
        %v591 = vunpack.c.l.b16 %v552
        %v592 = vunpack.c.l.b16 %v553
        %v593 = vunpack.c.l.b16 %v554
        %v594 = vunpack.c.l.b16 %v555
        %v595 = vunpack.c.l.b16 %v556
        %v596 = vunpack.c.l.b16 %v557
        %v597 = vpack.c.b16 %v582, %v581
        %v598 = vpack.c.b16 %v584, %v583
        %v599 = vpack.c.b16 %v586, %v585
        %v600 = vpack.c.b16 %v588, %v587
        %v601 = vpack.c.b16 %v590, %v589
        %v602 = vpack.c.b16 %v592, %v591
        %v603 = vpack.c.b16 %v594, %v593
        %v604 = vpack.c.b16 %v596, %v595
        %613 = vmatprep.subr.bf16.mxu0 0
        %614 = vmatpush1.bf16.msra.mxu0 %v604
        %615 = vmatprep.subr.bf16.mxu0 0
        %616 = vmatpush1.bf16.msra.mxu0 %v603
        %617 = vmatprep.subr.bf16.mxu0 0
        %618 = vmatpush1.bf16.msra.mxu0 %v602
        %619 = vmatprep.subr.bf16.mxu0 0
        %620 = vmatpush1.bf16.msra.mxu0 %v601
        %621 = vmatprep.subr.bf16.mxu0 0
        %622 = vmatpush1.bf16.msra.mxu0 %v600
        %623 = vmatprep.subr.bf16.mxu0 0
        %624 = vmatpush1.bf16.msra.mxu0 %v599
        %625 = vmatprep.subr.bf16.mxu0 0
        %626 = vmatpush1.bf16.msra.mxu0 %v598
        %627 = vmatprep.subr.bf16.mxu0 0
        %628 = vmatpush1.bf16.msra.mxu0 %v597
        %629 = vmatprep.subr.bf16.mxu0 0
        %630 = vmatpush2.bf16.msra.mxu0 0
        %631 = vmatprep.subr.bf16.mxu0 0
        %632 = vmatpush2.bf16.msra.mxu0 0
        %633 = vmatprep.subr.bf16.mxu0 0
        %634 = vmatpush2.bf16.msra.mxu0 0
        %635 = vmatprep.subr.bf16.mxu0 0
        %636 = vmatpush2.bf16.msra.mxu0 0
        %637 = vmatprep.subr.bf16.mxu0 0
        %638 = vmatpush2.bf16.msra.mxu0 0
        %639 = vmatprep.subr.bf16.mxu0 0
        %640 = vmatpush2.bf16.msra.mxu0 0
        %641 = vmatprep.subr.bf16.mxu0 0
        %642 = vmatpush2.bf16.msra.mxu0 0
        %643 = vmatprep.subr.bf16.mxu0 0
        %644 = vmatpush2.bf16.msra.mxu0 0
        %645 = vmatprep.mubr.bf16.mxu0 0
        %646 = vmatmul.mubr.bf16.gmra.mxu0 %v540
        %v647 = vpop.f32.mrf.mxu0
        %v648 = vadd.f32 %v563, %v647
        %v649 = vpop.f32.mrf.mxu0
        %v650 = vpop.f32.mrf.mxu0
        %v651 = vadd.f32 %v563, %v650
        %v652 = vpop.f32.mrf.mxu0
        %653 = vmatprep.mubr.bf16.mxu0 0
        %654 = vmatmul.mubr.bf16.gmra.mxu0 %v541
        %v655 = vpop.f32.mrf.mxu0
        %v656 = vadd.f32 %v563, %v655
        %v657 = vpop.f32.mrf.mxu0
        %v658 = vpop.f32.mrf.mxu0
        %v659 = vadd.f32 %v563, %v658
        %v660 = vpop.f32.mrf.mxu0
        %661 = vdwg.mxu0
        %v662 = vld [vmem:[%s6] sm:$0x1]
        %v663 = vld [vmem:[%s7] sm:$0x1]
        %664 = vadd.xlane.f32.xlu0 %v648
        %v665 = vpop.xlane.xlu0 %664
        %666 = vadd.xlane.f32.xlu0 %v651
        %v667 = vpop.xlane.xlu0 %666
        %668 = vadd.xlane.f32.xlu0 %v656
        %v669 = vpop.xlane.xlu0 %668
        %670 = vadd.xlane.f32.xlu0 %v659
        %v671 = vpop.xlane.xlu0 %670
        %v672 = vrcp.pop 128.0
        %v673 = vmul.f32 %v665, %v672
        %v674 = vmul.f32 %v667, %v672
        %v675 = vmul.f32 %v669, %v672
        %v676 = vmul.f32 %v671, %v672
        %v677 = vmul.f32 %v648, %v648
        %v678 = vmul.f32 %v651, %v651
        %v679 = vmul.f32 %v656, %v656
        %v680 = vmul.f32 %v659, %v659
        %681 = vadd.xlane.f32.xlu0 %v677
        %v682 = vpop.xlane.xlu0 %681
        %683 = vadd.xlane.f32.xlu0 %v678
        %v684 = vpop.xlane.xlu0 %683
        %685 = vadd.xlane.f32.xlu0 %v679
        %v686 = vpop.xlane.xlu0 %685
        %687 = vadd.xlane.f32.xlu0 %v680
        %v688 = vpop.xlane.xlu0 %687
        %v689 = vmul.f32 %v682, %v672
        %v690 = vmul.f32 %v684, %v672
        %v691 = vmul.f32 %v686, %v672
        %v692 = vmul.f32 %v688, %v672
        %v693 = vmul.f32 %v673, %v673
        %v694 = vmul.f32 %v674, %v674
        %v695 = vmul.f32 %v675, %v675
        %v696 = vmul.f32 %v676, %v676
        %v697 = vsub.f32 %v689, %v693
        %v698 = vsub.f32 %v690, %v694
        %v699 = vsub.f32 %v691, %v695
        %v700 = vsub.f32 %v692, %v696
        %v701 = vsub.f32 %v648, %v673
        %v702 = vsub.f32 %v651, %v674
        %v703 = vsub.f32 %v656, %v675
        %v704 = vsub.f32 %v659, %v676
        %v705 = vadd.f32 %v697, 1e-05
        %v706 = vadd.f32 %v698, 1e-05
        %v707 = vadd.f32 %v699, 1e-05
        %v708 = vadd.f32 %v700, 1e-05
        %v709 = vrsqrt.pop %v705
        %v710 = vrsqrt.pop %v706
        %v711 = vrsqrt.pop %v707
        %v712 = vrsqrt.pop %v708
        %v713 = vmul.f32 %v701, %v709
        %v714 = vmul.f32 %v702, %v710
        %v715 = vmul.f32 %v703, %v711
        %v716 = vmul.f32 %v704, %v712
        %v718 = vlaneseq
        %v719 = vshrl.u32 %v718, 7
        %v720 = vsub.s32 0, %v719
        %v721 = vrot.slane %v662, %v720
        %v723 = vmul.f32 %v713, %v721
        %v724 = vmul.f32 %v714, %v721
        %v725 = vmul.f32 %v715, %v721
        %v726 = vmul.f32 %v716, %v721
        %v728 = vlaneseq
        %v729 = vshrl.u32 %v728, 7
        %v730 = vsub.s32 0, %v729
        %v731 = vrot.slane %v663, %v730
        %v733 = vadd.f32 %v723, %v731
        %v734 = vadd.f32 %v724, %v731
        %v735 = vadd.f32 %v725, %v731
        %v736 = vadd.f32 %v726, %v731
        %v737 = vpack.c.bf16 %v734, %v733
        %v738 = vpack.c.bf16 %v736, %v735
        %v741 = vunpack.c.l.b16 %v737
        %v742 = vunpack.c.h.b16 %v737
        %v743 = vunpack.c.l.b16 %v738
        %v744 = vunpack.c.h.b16 %v738
        %v745 = vpack.c.b16 %v741, %v741
        %v746 = vpack.c.b16 %v742, %v742
        %v747 = vpack.c.b16 %v743, %v743
        %v748 = vpack.c.b16 %v744, %v744
        %753 = vst [vmem:[%s335] sm:$0xf] %v745
        %754 = vst [vmem:[%s335 + $0x4] sm:$0xf] %v746
        %755 = vst [vmem:[%s335 + $0x8] sm:$0xf] %v747
        %756 = vst [vmem:[%s335 + $0xc] sm:$0xf] %v748
        %s757 = sand.u32 %s205, 1
        %s758 = sand.u32 %s205, 1
        %s759 = smul.addr %s758, 16
        %s760 = scalar_lea.vmem [#allocation2], %s759
        // Predicated region
        $region53: #{encoder_forward.3} parent=51 // pred_check
          %p761 = pneg %p215
        $region54: #{encoder_forward.3} parent=51 // pred_check_branch
          %763 = sbr.rel (%p761) target = $region56
        $region55: #{encoder_forward.3} parent=51 // pred_region
          %s764 = smul.u32 4, %s19
          %s765 = ssub.s32 7, %s764
          %p766 = scmp.lt.s32.totalorder %s765, 4
          %s767 = scalar_select %p766, %s765, 4
          %s768 = smul.u32 64, %s767
          %p769 = scmp.ne.s32.totalorder 0, %s768
          %s770 = smul.addr %s764, 4
          %s771 = scalar_lea.vmem %s8, %s770
          // Predicated region
          $region57: #{encoder_forward.3} parent=55 // pred_check
            %p772 = pneg %p769
          $region58: #{encoder_forward.3} parent=55 // pred_check_branch
            %774 = sbr.rel (%p772) target = $region60
          $region59: #{encoder_forward.3} parent=55 // pred_region
            // Predicated region
            $region61: #{encoder_forward.3} parent=59 // pred_check
              _
            $region62: #{encoder_forward.3} parent=59 // pred_check_branch
              %776 = sbr.rel target = $region64
            $region63: #{encoder_forward.3} parent=59 // pred_region
              // Predicated region
              $region83: #{encoder_forward.3} parent=63 // pred_check
                _
              $region84: #{encoder_forward.3} parent=63 // pred_check_branch
                %832 = sbr.rel (0) target = $region86
              $region85: #{encoder_forward.3} parent=63 // pred_region
                %s834 = ssub.s32 16, 1
                %s835 = sshrl.u32 %s767, 2
                // While loop
                $region87: #{encoder_forward.3} parent=85 // loop_pre_header
                  _
                $region88: #{encoder_forward.3} parent=85 // loop_header
                  %s837 = sphi 0, %s839
                  %p838 = scmp.ge.s32.totalorder %s837, %s835
                  %s842 = sphi 0, %s855
                  %s843 = sphi %s760, %s858
                  %s844 = sphi %s771, %s859
                $region89: #{encoder_forward.3} parent=85 // loop_header_branch
                  %841 = sbr.rel (%p838) target = $region93
                $region90: #{encoder_forward.3} parent=85 // loop_body
                  %v845 = vld [vmem:[%s843] sm:%s834]
                  %846 = vst [vmem:[%s844] sm:%s834] %v845
                  %v847 = vld [vmem:[%s843 + $0x4] sm:%s834]
                  %848 = vst [vmem:[%s844 + $0x4] sm:%s834] %v847
                  %v849 = vld [vmem:[%s843 + $0x8] sm:%s834]
                  %850 = vst [vmem:[%s844 + $0x8] sm:%s834] %v849
                  %v851 = vld [vmem:[%s843 + $0xc] sm:%s834]
                  %852 = vst [vmem:[%s844 + $0xc] sm:%s834] %v851
                  %s853 = sadd.s32 1, %s842
                  %p854 = scmp.ge.s32.totalorder %s853, %s835
                  %s855 = scalar_select %p854, 0, %s853
                  %s856 = smul.u32 %s855, 16
                  %s857 = smul.u32 %s855, 16
                  %s858 = scalar_lea.vmem %s760, %s856 [#allocation2]
                  %s859 = scalar_lea.vmem %s771, %s857
                $region91: #{encoder_forward.3} parent=85 // loop_footer
                  %s839 = sadd.s32 %s837, 1
                $region92: #{encoder_forward.3} parent=85 // loop_footer_branch
                  %836 = sbr.rel target = $region88
                $region93: #{encoder_forward.3} parent=85 // loop_exit
                  _
                %s860 = sshrl.u32 %s767, 2
                %s861 = sand.u32 %s767, 3
                %s862 = smul.u32 %s860, 4
                %s863 = smul.u32 4, %s862
                %s864 = scalar_lea.vmem %s760, %s863 [#allocation2]
                %s865 = smul.u32 4, %s862
                %s866 = scalar_lea.vmem %s771, %s865
                // While loop
                $region94: #{encoder_forward.3} parent=85 // loop_pre_header
                  _
                $region95: #{encoder_forward.3} parent=85 // loop_header
                  %s868 = sphi 0, %s870
                  %p869 = scmp.ge.s32.totalorder %s868, %s861
                  %s873 = sphi 0, %s880
                  %s874 = sphi %s864, %s883
                  %s875 = sphi %s866, %s884
                $region96: #{encoder_forward.3} parent=85 // loop_header_branch
                  %872 = sbr.rel (%p869) target = $region100
                $region97: #{encoder_forward.3} parent=85 // loop_body
                  %v876 = vld [vmem:[%s874] sm:%s834]
                  %877 = vst [vmem:[%s875] sm:%s834] %v876
                  %s878 = sadd.s32 1, %s873
                  %p879 = scmp.ge.s32.totalorder %s878, %s861
                  %s880 = scalar_select %p879, 0, %s878
                  %s881 = smul.u32 %s880, 4
                  %s882 = smul.u32 %s880, 4
                  %s883 = scalar_lea.vmem %s864, %s881 [#allocation2]
                  %s884 = scalar_lea.vmem %s866, %s882
                $region98: #{encoder_forward.3} parent=85 // loop_footer
                  %s870 = sadd.s32 %s868, 1
                $region99: #{encoder_forward.3} parent=85 // loop_footer_branch
                  %867 = sbr.rel target = $region95
                $region100: #{encoder_forward.3} parent=85 // loop_exit
                  _
              $region86: #{encoder_forward.3} parent=63 // pred_fallthru
                _
            $region64: #{encoder_forward.3} parent=59 // pred_fallthru
              _
            // Predicated region
            $region65: #{encoder_forward.3} parent=59 // pred_check
              _
            $region66: #{encoder_forward.3} parent=59 // pred_check_branch
              %778 = sbr.rel (0) target = $region68
            $region67: #{encoder_forward.3} parent=59 // pred_region
              %s780 = ssub.s32 16, 1
              %s781 = sshrl.u32 %s767, 2
              // While loop
              $region69: #{encoder_forward.3} parent=67 // loop_pre_header
                _
              $region70: #{encoder_forward.3} parent=67 // loop_header
                %s783 = sphi 0, %s785
                %p784 = scmp.ge.s32.totalorder %s783, %s781
                %s788 = sphi 0, %s801
                %s789 = sphi %s760, %s804
                %s790 = sphi %s771, %s805
              $region71: #{encoder_forward.3} parent=67 // loop_header_branch
                %787 = sbr.rel (%p784) target = $region75
              $region72: #{encoder_forward.3} parent=67 // loop_body
                %v791 = vld [vmem:[%s789] sm:%s780]
                %792 = vst [vmem:[%s790] sm:%s780] %v791
                %v793 = vld [vmem:[%s789 + $0x4] sm:%s780]
                %794 = vst [vmem:[%s790 + $0x4] sm:%s780] %v793
                %v795 = vld [vmem:[%s789 + $0x8] sm:%s780]
                %796 = vst [vmem:[%s790 + $0x8] sm:%s780] %v795
                %v797 = vld [vmem:[%s789 + $0xc] sm:%s780]
                %798 = vst [vmem:[%s790 + $0xc] sm:%s780] %v797
                %s799 = sadd.s32 1, %s788
                %p800 = scmp.ge.s32.totalorder %s799, %s781
                %s801 = scalar_select %p800, 0, %s799
                %s802 = smul.u32 %s801, 16
                %s803 = smul.u32 %s801, 16
                %s804 = scalar_lea.vmem %s760, %s802 [#allocation2]
                %s805 = scalar_lea.vmem %s771, %s803
              $region73: #{encoder_forward.3} parent=67 // loop_footer
                %s785 = sadd.s32 %s783, 1
              $region74: #{encoder_forward.3} parent=67 // loop_footer_branch
                %782 = sbr.rel target = $region70
              $region75: #{encoder_forward.3} parent=67 // loop_exit
                _
              %s806 = sshrl.u32 %s767, 2
              %s807 = sand.u32 %s767, 3
              %s808 = smul.u32 %s806, 4
              %s809 = smul.u32 4, %s808
              %s810 = scalar_lea.vmem %s760, %s809 [#allocation2]
              %s811 = smul.u32 4, %s808
              %s812 = scalar_lea.vmem %s771, %s811
              // While loop
              $region76: #{encoder_forward.3} parent=67 // loop_pre_header
                _
              $region77: #{encoder_forward.3} parent=67 // loop_header
                %s814 = sphi 0, %s816
                %p815 = scmp.ge.s32.totalorder %s814, %s807
                %s819 = sphi 0, %s826
                %s820 = sphi %s810, %s829
                %s821 = sphi %s812, %s830
              $region78: #{encoder_forward.3} parent=67 // loop_header_branch
                %818 = sbr.rel (%p815) target = $region82
              $region79: #{encoder_forward.3} parent=67 // loop_body
                %v822 = vld [vmem:[%s820] sm:%s780]
                %823 = vst [vmem:[%s821] sm:%s780] %v822
                %s824 = sadd.s32 1, %s819
                %p825 = scmp.ge.s32.totalorder %s824, %s807
                %s826 = scalar_select %p825, 0, %s824
                %s827 = smul.u32 %s826, 4
                %s828 = smul.u32 %s826, 4
                %s829 = scalar_lea.vmem %s810, %s827 [#allocation2]
                %s830 = scalar_lea.vmem %s812, %s828
              $region80: #{encoder_forward.3} parent=67 // loop_footer
                %s816 = sadd.s32 %s814, 1
              $region81: #{encoder_forward.3} parent=67 // loop_footer_branch
                %813 = sbr.rel target = $region77
              $region82: #{encoder_forward.3} parent=67 // loop_exit
                _
            $region68: #{encoder_forward.3} parent=59 // pred_fallthru
              _
          $region60: #{encoder_forward.3} parent=55 // pred_fallthru
            _
          %885 = vnop
        $region56: #{encoder_forward.3} parent=51 // pred_fallthru
          _
      $region52: #{encoder_forward.3} parent=5 // pred_fallthru
        _
      %p886 = scmp.le.s32.totalorder 2, %s14
      // Predicated region
      $region101: #{encoder_forward.3} parent=5 // pred_check
        %p887 = pneg %p886
      $region102: #{encoder_forward.3} parent=5 // pred_check_branch
        %889 = sbr.rel (%p887) target = $region104
      $region103: #{encoder_forward.3} parent=5 // pred_region
        %s890 = ssub.s32 %s14, 2
        // Predicated region
        $region105: #{encoder_forward.3} parent=103 // pred_check
          %p891 = pneg %p221
        $region106: #{encoder_forward.3} parent=103 // pred_check_branch
          %893 = sbr.rel (%p891) target = $region108
        $region107: #{encoder_forward.3} parent=103 // pred_region
          %s894 = sand.u32 %s206, 1
          %s895 = sand.u32 %s206, 1
          %s896 = smul.addr %s895, 16
          %s897 = scalar_lea.vmem [#allocation2], %s896
        $region108: #{encoder_forward.3} parent=103 // pred_fallthru
          _
      $region104: #{encoder_forward.3} parent=5 // pred_fallthru
        _
    $region6: #{encoder_forward.3} parent=1 // loop_footer
      %s18 = sadd.s32 1, %s14
    $region7: #{encoder_forward.3} parent=1 // loop_footer_branch
      %13 = sbr.rel target = $region3
    $region8: #{encoder_forward.3} parent=1 // loop_exit
      _

// kernel: encoder_forward.2
$region0: #{encoder_forward.2}
  #allocation0 [shape = 'u32[]', space=smem, size = 0x4, offset = 0x4, fixed_abs, tag = 'smem constant byte address 0x4 - core index']
  #allocation1 [shape = 'u32[144,128]{1,0:T(1,128)}', space=vmem, size = 0x12000, scoped, tag = 'internal scratch']
  %s0 = inlined_call_operand.vmem [shape: f32[40,2], index: 0, kind: input, shape index: {}]
  %s1 = inlined_call_operand.vmem [shape: f32[40,9], index: 1, kind: input, shape index: {}]
  %s2 = inlined_call_operand.vmem [shape: f32[2,128], index: 2, kind: input, shape index: {}]
  %s3 = inlined_call_operand.vmem [shape: f32[9,128], index: 3, kind: input, shape index: {}]
  %s4 = inlined_call_operand.vmem [shape: f32[1,128], index: 4, kind: input, shape index: {}]
  %s5 = inlined_call_operand.vmem [shape: bf16[128,128], index: 5, kind: input, shape index: {}]
  %s6 = inlined_call_operand.vmem [shape: f32[1,128], index: 6, kind: input, shape index: {}]
  %s7 = inlined_call_operand.vmem [shape: f32[1,128], index: 7, kind: input, shape index: {}]
  %s8 = inlined_call_operand.vmem [shape: f32[1,128], index: 8, kind: input, shape index: {}]
  %s9 = inlined_call_operand.vmem [shape: bf16[40,128], index: 9, kind: output, shape index: {}]
  %s10 = sld [smem:[#allocation0]]
  $region113: #{encoder_forward.2} parent=0
    _
  %s12 = ssub.s32 1, %s10
  %s13 = scalar_select 0, %s12, %s10
  $region1: #{encoder_forward.2} parent=0
    #allocation2 [shape = 'u8[16384]{0}', space=vmem, size = 0x4000, scoped, tag = 'output window, operand 0']
    loop: start=0, step=1, limit=4
    $region2: #{encoder_forward.2} parent=1 // loop_pre_header
      _
    $region3: #{encoder_forward.2} parent=1 // loop_header
      %s15 = sphi 0, %s19
      %p16 = scmp.ge.s32.totalorder %s15, 4
      %s25 = sphi 0, %s27
      %s28 = sphi 0, %s25
      %s29 = sphi 0, %s28
      %s45 = sphi 0, %s29
      %s51 = sphi 0, %s53
      %s54 = sphi 0, %s51
      %s55 = sphi 0, %s54
      %s71 = sphi 0, %s55
      %s75 = sphi 0, %s75
      %s77 = sphi 0, %s75
      %s78 = sphi 0, %s77
      %s92 = sphi 0, %s78
      %s96 = sphi 0, %s96
      %s98 = sphi 0, %s96
      %s99 = sphi 0, %s98
      %s113 = sphi 0, %s99
      %s117 = sphi 0, %s117
      %s119 = sphi 0, %s117
      %s120 = sphi 0, %s119
      %s134 = sphi 0, %s120
      %s138 = sphi 0, %s138
      %s140 = sphi 0, %s138
      %s141 = sphi 0, %s140
      %s155 = sphi 0, %s141
      %s159 = sphi 0, %s159
      %s161 = sphi 0, %s159
      %s162 = sphi 0, %s161
      %s176 = sphi 0, %s162
      %s180 = sphi 0, %s180
      %s182 = sphi 0, %s180
      %s183 = sphi 0, %s182
      %s197 = sphi 0, %s183
      %s201 = sphi 0, %s201
      %s203 = sphi 0, %s201
      %s204 = sphi 0, %s203
      %s218 = sphi 0, %s204
      %s224 = sphi 0, %s226
      %s227 = sphi 0, %s224
      %s228 = sphi 0, %s227
      %s244 = sphi 0, %s228
    $region4: #{encoder_forward.2} parent=1 // loop_header_branch
      %18 = sbr.rel (%p16) target = $region8
    $region5: #{encoder_forward.2} parent=1 // loop_body
      %s20 = ssub.s32 %s15, 1
      %s21 = ssub.s32 %s15, 2
      %s22 = sadd.s32 %s15, 1
      %s23 = ssub.s32 %s15, %s22
      %p24 = scmp.eq.s32.totalorder %s23, 0
      %s26 = sadd.s32 %s25, 1
      %s27 = scalar_select %p24, %s25, %s26
      %p30 = pneg %p24
      %p31 = scmp.eq.s32.totalorder %s15, 1
      %p32 = por %p30, %p31
      %p33 = scmp.ne.s32.totalorder %s25, %s28
      %p34 = scmp.eq.s32.totalorder %s15, 0
      %p35 = por %p33, %p34
      %p36 = scmp.ne.s32.totalorder %s25, %s28
      %p37 = scmp.eq.s32.totalorder %s20, 1
      %p38 = por %p36, %p37
      %p39 = scmp.ne.s32.totalorder %s28, %s29
      %p40 = scmp.eq.s32.totalorder %s20, 0
      %p41 = por %p39, %p40
      %p42 = scmp.ne.s32.totalorder %s28, %s29
      %p43 = scmp.eq.s32.totalorder %s21, 1
      %p44 = por %p42, %p43
      %p46 = scmp.ne.s32.totalorder %s29, %s45
      %p47 = scmp.eq.s32.totalorder %s21, 0
      %p48 = por %p46, %p47
      %s49 = ssub.s32 %s15, %s22
      %p50 = scmp.eq.s32.totalorder %s49, 0
      %s52 = sadd.s32 %s51, 1
      %s53 = scalar_select %p50, %s51, %s52
      %p56 = pneg %p50
      %p57 = scmp.eq.s32.totalorder %s15, 1
      %p58 = por %p56, %p57
      %p59 = scmp.ne.s32.totalorder %s51, %s54
      %p60 = scmp.eq.s32.totalorder %s15, 0
      %p61 = por %p59, %p60
      %p62 = scmp.ne.s32.totalorder %s51, %s54
      %p63 = scmp.eq.s32.totalorder %s20, 1
      %p64 = por %p62, %p63
      %p65 = scmp.ne.s32.totalorder %s54, %s55
      %p66 = scmp.eq.s32.totalorder %s20, 0
      %p67 = por %p65, %p66
      %p68 = scmp.ne.s32.totalorder %s54, %s55
      %p69 = scmp.eq.s32.totalorder %s21, 1
      %p70 = por %p68, %p69
      %p72 = scmp.ne.s32.totalorder %s55, %s71
      %p73 = scmp.eq.s32.totalorder %s21, 0
      %p74 = por %p72, %p73
      %s76 = sadd.s32 %s75, 1
      %p79 = scmp.eq.s32.totalorder %s15, 1
      %p80 = scmp.ne.s32.totalorder %s75, %s77
      %p81 = scmp.eq.s32.totalorder %s15, 0
      %p82 = por %p80, %p81
      %p83 = scmp.ne.s32.totalorder %s75, %s77
      %p84 = scmp.eq.s32.totalorder %s20, 1
      %p85 = por %p83, %p84
      %p86 = scmp.ne.s32.totalorder %s77, %s78
      %p87 = scmp.eq.s32.totalorder %s20, 0
      %p88 = por %p86, %p87
      %p89 = scmp.ne.s32.totalorder %s77, %s78
      %p90 = scmp.eq.s32.totalorder %s21, 1
      %p91 = por %p89, %p90
      %p93 = scmp.ne.s32.totalorder %s78, %s92
      %p94 = scmp.eq.s32.totalorder %s21, 0
      %p95 = por %p93, %p94
      %s97 = sadd.s32 %s96, 1
      %p100 = scmp.eq.s32.totalorder %s15, 1
      %p101 = scmp.ne.s32.totalorder %s96, %s98
      %p102 = scmp.eq.s32.totalorder %s15, 0
      %p103 = por %p101, %p102
      %p104 = scmp.ne.s32.totalorder %s96, %s98
      %p105 = scmp.eq.s32.totalorder %s20, 1
      %p106 = por %p104, %p105
      %p107 = scmp.ne.s32.totalorder %s98, %s99
      %p108 = scmp.eq.s32.totalorder %s20, 0
      %p109 = por %p107, %p108
      %p110 = scmp.ne.s32.totalorder %s98, %s99
      %p111 = scmp.eq.s32.totalorder %s21, 1
      %p112 = por %p110, %p111
      %p114 = scmp.ne.s32.totalorder %s99, %s113
      %p115 = scmp.eq.s32.totalorder %s21, 0
      %p116 = por %p114, %p115
      %s118 = sadd.s32 %s117, 1
      %p121 = scmp.eq.s32.totalorder %s15, 1
      %p122 = scmp.ne.s32.totalorder %s117, %s119
      %p123 = scmp.eq.s32.totalorder %s15, 0
      %p124 = por %p122, %p123
      %p125 = scmp.ne.s32.totalorder %s117, %s119
      %p126 = scmp.eq.s32.totalorder %s20, 1
      %p127 = por %p125, %p126
      %p128 = scmp.ne.s32.totalorder %s119, %s120
      %p129 = scmp.eq.s32.totalorder %s20, 0
      %p130 = por %p128, %p129
      %p131 = scmp.ne.s32.totalorder %s119, %s120
      %p132 = scmp.eq.s32.totalorder %s21, 1
      %p133 = por %p131, %p132
      %p135 = scmp.ne.s32.totalorder %s120, %s134
      %p136 = scmp.eq.s32.totalorder %s21, 0
      %p137 = por %p135, %p136
      %s139 = sadd.s32 %s138, 1
      %p142 = scmp.eq.s32.totalorder %s15, 1
      %p143 = scmp.ne.s32.totalorder %s138, %s140
      %p144 = scmp.eq.s32.totalorder %s15, 0
      %p145 = por %p143, %p144
      %p146 = scmp.ne.s32.totalorder %s138, %s140
      %p147 = scmp.eq.s32.totalorder %s20, 1
      %p148 = por %p146, %p147
      %p149 = scmp.ne.s32.totalorder %s140, %s141
      %p150 = scmp.eq.s32.totalorder %s20, 0
      %p151 = por %p149, %p150
      %p152 = scmp.ne.s32.totalorder %s140, %s141
      %p153 = scmp.eq.s32.totalorder %s21, 1
      %p154 = por %p152, %p153
      %p156 = scmp.ne.s32.totalorder %s141, %s155
      %p157 = scmp.eq.s32.totalorder %s21, 0
      %p158 = por %p156, %p157
      %s160 = sadd.s32 %s159, 1
      %p163 = scmp.eq.s32.totalorder %s15, 1
      %p164 = scmp.ne.s32.totalorder %s159, %s161
      %p165 = scmp.eq.s32.totalorder %s15, 0
      %p166 = por %p164, %p165
      %p167 = scmp.ne.s32.totalorder %s159, %s161
      %p168 = scmp.eq.s32.totalorder %s20, 1
      %p169 = por %p167, %p168
      %p170 = scmp.ne.s32.totalorder %s161, %s162
      %p171 = scmp.eq.s32.totalorder %s20, 0
      %p172 = por %p170, %p171
      %p173 = scmp.ne.s32.totalorder %s161, %s162
      %p174 = scmp.eq.s32.totalorder %s21, 1
      %p175 = por %p173, %p174
      %p177 = scmp.ne.s32.totalorder %s162, %s176
      %p178 = scmp.eq.s32.totalorder %s21, 0
      %p179 = por %p177, %p178
      %s181 = sadd.s32 %s180, 1
      %p184 = scmp.eq.s32.totalorder %s15, 1
      %p185 = scmp.ne.s32.totalorder %s180, %s182
      %p186 = scmp.eq.s32.totalorder %s15, 0
      %p187 = por %p185, %p186
      %p188 = scmp.ne.s32.totalorder %s180, %s182
      %p189 = scmp.eq.s32.totalorder %s20, 1
      %p190 = por %p188, %p189
      %p191 = scmp.ne.s32.totalorder %s182, %s183
      %p192 = scmp.eq.s32.totalorder %s20, 0
      %p193 = por %p191, %p192
      %p194 = scmp.ne.s32.totalorder %s182, %s183
      %p195 = scmp.eq.s32.totalorder %s21, 1
      %p196 = por %p194, %p195
      %p198 = scmp.ne.s32.totalorder %s183, %s197
      %p199 = scmp.eq.s32.totalorder %s21, 0
      %p200 = por %p198, %p199
      %s202 = sadd.s32 %s201, 1
      %p205 = scmp.eq.s32.totalorder %s15, 1
      %p206 = scmp.ne.s32.totalorder %s201, %s203
      %p207 = scmp.eq.s32.totalorder %s15, 0
      %p208 = por %p206, %p207
      %p209 = scmp.ne.s32.totalorder %s201, %s203
      %p210 = scmp.eq.s32.totalorder %s20, 1
      %p211 = por %p209, %p210
      %p212 = scmp.ne.s32.totalorder %s203, %s204
      %p213 = scmp.eq.s32.totalorder %s20, 0
      %p214 = por %p212, %p213
      %p215 = scmp.ne.s32.totalorder %s203, %s204
      %p216 = scmp.eq.s32.totalorder %s21, 1
      %p217 = por %p215, %p216
      %p219 = scmp.ne.s32.totalorder %s204, %s218
      %p220 = scmp.eq.s32.totalorder %s21, 0
      %p221 = por %p219, %p220
      %s222 = ssub.s32 %s15, %s22
      %p223 = scmp.eq.s32.totalorder %s222, 0
      %s225 = sadd.s32 %s224, 1
      %s226 = scalar_select %p223, %s224, %s225
      %p229 = pneg %p223
      %p230 = scmp.eq.s32.totalorder %s15, 1
      %p231 = por %p229, %p230
      %p232 = scmp.ne.s32.totalorder %s224, %s227
      %p233 = scmp.eq.s32.totalorder %s15, 0
      %p234 = por %p232, %p233
      %p235 = scmp.ne.s32.totalorder %s224, %s227
      %p236 = scmp.eq.s32.totalorder %s20, 1
      %p237 = por %p235, %p236
      %p238 = scmp.ne.s32.totalorder %s227, %s228
      %p239 = scmp.eq.s32.totalorder %s20, 0
      %p240 = por %p238, %p239
      %p241 = scmp.ne.s32.totalorder %s227, %s228
      %p242 = scmp.eq.s32.totalorder %s21, 1
      %p243 = por %p241, %p242
      %p245 = scmp.ne.s32.totalorder %s228, %s244
      %p246 = scmp.eq.s32.totalorder %s21, 0
      %p247 = por %p245, %p246
      %p248 = scmp.le.s32.totalorder 1, %s15
      %p249 = scmp.lt.s32.totalorder %s15, 3
      %p250 = pnand %p248, %p249
      %p251 = pneg %p250
      // Predicated region
      $region9: #{encoder_forward.2} parent=5 // pred_check
        _
      $region10: #{encoder_forward.2} parent=5 // pred_check_branch
        %253 = sbr.rel (%p250) target = $region12
      $region11: #{encoder_forward.2} parent=5 // pred_region
        %s254 = ssub.s32 %s15, 1
        // Predicated region
        $region13: #{encoder_forward.2} parent=11 // pred_check
          %p255 = pneg %p88
        $region14: #{encoder_forward.2} parent=11 // pred_check_branch
          %257 = sbr.rel (%p255) target = $region16
        $region15: #{encoder_forward.2} parent=11 // pred_region
          _
        $region16: #{encoder_forward.2} parent=11 // pred_fallthru
          _
        // Predicated region
        $region17: #{encoder_forward.2} parent=11 // pred_check
          %p258 = pneg %p109
        $region18: #{encoder_forward.2} parent=11 // pred_check_branch
          %260 = sbr.rel (%p258) target = $region20
        $region19: #{encoder_forward.2} parent=11 // pred_region
          _
        $region20: #{encoder_forward.2} parent=11 // pred_fallthru
          _
        // Predicated region
        $region21: #{encoder_forward.2} parent=11 // pred_check
          %p261 = pneg %p130
        $region22: #{encoder_forward.2} parent=11 // pred_check_branch
          %263 = sbr.rel (%p261) target = $region24
        $region23: #{encoder_forward.2} parent=11 // pred_region
          _
        $region24: #{encoder_forward.2} parent=11 // pred_fallthru
          _
        // Predicated region
        $region25: #{encoder_forward.2} parent=11 // pred_check
          %p264 = pneg %p151
        $region26: #{encoder_forward.2} parent=11 // pred_check_branch
          %266 = sbr.rel (%p264) target = $region28
        $region27: #{encoder_forward.2} parent=11 // pred_region
          _
        $region28: #{encoder_forward.2} parent=11 // pred_fallthru
          _
        // Predicated region
        $region29: #{encoder_forward.2} parent=11 // pred_check
          %p267 = pneg %p172
        $region30: #{encoder_forward.2} parent=11 // pred_check_branch
          %269 = sbr.rel (%p267) target = $region32
        $region31: #{encoder_forward.2} parent=11 // pred_region
          _
        $region32: #{encoder_forward.2} parent=11 // pred_fallthru
          _
        // Predicated region
        $region33: #{encoder_forward.2} parent=11 // pred_check
          %p270 = pneg %p193
        $region34: #{encoder_forward.2} parent=11 // pred_check_branch
          %272 = sbr.rel (%p270) target = $region36
        $region35: #{encoder_forward.2} parent=11 // pred_region
          _
        $region36: #{encoder_forward.2} parent=11 // pred_fallthru
          _
        // Predicated region
        $region37: #{encoder_forward.2} parent=11 // pred_check
          %p273 = pneg %p214
        $region38: #{encoder_forward.2} parent=11 // pred_check_branch
          %275 = sbr.rel (%p273) target = $region40
        $region39: #{encoder_forward.2} parent=11 // pred_region
          _
        $region40: #{encoder_forward.2} parent=11 // pred_fallthru
          _
      $region12: #{encoder_forward.2} parent=5 // pred_fallthru
        _
      %p276 = scmp.lt.s32.totalorder %s15, 2
      // Predicated region
      $region41: #{encoder_forward.2} parent=5 // pred_check
        %p277 = pneg %p276
      $region42: #{encoder_forward.2} parent=5 // pred_check_branch
        %279 = sbr.rel (%p277) target = $region44
      $region43: #{encoder_forward.2} parent=5 // pred_region
        // Predicated region
        $region45: #{encoder_forward.2} parent=43 // pred_check
          %p280 = pneg %p35
        $region46: #{encoder_forward.2} parent=43 // pred_check_branch
          %282 = sbr.rel (%p280) target = $region48
        $region47: #{encoder_forward.2} parent=43 // pred_region
          %s283 = smul.u32 4, %s15
          %s284 = ssub.s32 5, %s283
          %p285 = scmp.lt.s32.totalorder %s284, 4
          %s286 = scalar_select %p285, %s284, 4
          %s287 = smul.u32 128, %s286
          %p288 = scmp.lt.s32.totalorder %s283, 4
          %s289 = scalar_select %p288, %s283, 4
          %s290 = smul.addr %s289, 8
          %s291 = scalar_lea.vmem %s0, %s290
          %s292 = smul.u32 4, %s15
          %s293 = ssub.s32 5, %s292
          %p294 = scmp.lt.s32.totalorder %s293, 4
          %s295 = scalar_select %p294, %s293, 4
          %s296 = smul.u32 128, %s295
        $region48: #{encoder_forward.2} parent=43 // pred_fallthru
          _
        // Predicated region
        $region49: #{encoder_forward.2} parent=43 // pred_check
          %p297 = pneg %p61
        $region50: #{encoder_forward.2} parent=43 // pred_check_branch
          %299 = sbr.rel (%p297) target = $region52
        $region51: #{encoder_forward.2} parent=43 // pred_region
          %s300 = smul.u32 4, %s15
          %s301 = ssub.s32 5, %s300
          %p302 = scmp.lt.s32.totalorder %s301, 4
          %s303 = scalar_select %p302, %s301, 4
          %s304 = smul.u32 128, %s303
          %p305 = scmp.lt.s32.totalorder %s300, 4
          %s306 = scalar_select %p305, %s300, 4
          %s307 = smul.addr %s306, 8
          %s308 = scalar_lea.vmem %s1, %s307
          %s309 = smul.u32 4, %s15
          %s310 = ssub.s32 5, %s309
          %p311 = scmp.lt.s32.totalorder %s310, 4
          %s312 = scalar_select %p311, %s310, 4
          %s313 = smul.u32 128, %s312
        $region52: #{encoder_forward.2} parent=43 // pred_fallthru
          _
      $region44: #{encoder_forward.2} parent=5 // pred_fallthru
        _
      %p314 = scmp.le.s32.totalorder 1, %s15
      %p315 = scmp.lt.s32.totalorder %s15, 3
      %p316 = pnand %p314, %p315
      %p317 = pneg %p316
      // Predicated region
      $region53: #{encoder_forward.2} parent=5 // pred_check
        _
      $region54: #{encoder_forward.2} parent=5 // pred_check_branch
        %319 = sbr.rel (%p316) target = $region56
      $region55: #{encoder_forward.2} parent=5 // pred_region
        %s320 = ssub.s32 %s15, 1
        %s321 = smul.u32 4, %s20
        %s322 = ssub.s32 5, %s321
        %p323 = scmp.lt.s32.totalorder %s322, 4
        %s324 = scalar_select %p323, %s322, 4
        %s325 = smul.u32 128, %s324
        %p326 = scmp.lt.s32.totalorder %s321, 4
        %s327 = scalar_select %p326, %s321, 4
        %s328 = smul.addr %s327, 8
        %s329 = scalar_lea.vmem %s0, %s328
        %p330 = pneg %p41
        %p331 = pneg %p38
        %s332 = smul.u32 4, %s20
        %s333 = ssub.s32 5, %s332
        %p334 = scmp.lt.s32.totalorder %s333, 4
        %s335 = scalar_select %p334, %s333, 4
        %s336 = smul.u32 128, %s335
        %p337 = scmp.lt.s32.totalorder %s332, 4
        %s338 = scalar_select %p337, %s332, 4
        %s339 = smul.addr %s338, 8
        %s340 = scalar_lea.vmem %s1, %s339
        %p341 = pneg %p67
        %p342 = pneg %p64
        %p343 = pneg %p88
        %p344 = pneg %p85
        %p345 = pneg %p109
        %p346 = pneg %p106
        %p347 = pneg %p130
        %p348 = pneg %p127
        %p349 = pneg %p151
        %p350 = pneg %p148
        %p351 = pneg %p172
        %p352 = pneg %p169
        %p353 = pneg %p193
        %p354 = pneg %p190
        %p355 = pneg %p214
        %p356 = pneg %p211
        %p357 = pneg %p240
        %p358 = pneg %p237
        %s359 = sand.u32 %s227, 1
        %s360 = sand.u32 %s227, 1
        %s361 = smul.addr %s360, 16
        %s362 = scalar_lea.vmem [#allocation2], %s361
        %s363 = smul.u32 4, %s20
        %s364 = ssub.s32 5, %s363
        %p365 = scmp.lt.s32.totalorder %s364, 4
        %s366 = scalar_select %p365, %s364, 4
        %s367 = smul.u32 128, %s366
        %p368 = scmp.lt.s32.totalorder %s363, 4
        %s369 = scalar_select %p368, %s363, 4
        %s370 = smul.addr %s369, 8
        %s371 = scalar_lea.vmem %s0, %s370
        %s372 = smul.u32 4, %s20
        %s373 = ssub.s32 5, %s372
        %p374 = scmp.lt.s32.totalorder %s373, 4
        %s375 = scalar_select %p374, %s373, 4
        %s376 = smul.u32 128, %s375
        %s377 = smul.u32 4, %s20
        %s378 = ssub.s32 5, %s377
        %p379 = scmp.lt.s32.totalorder %s378, 4
        %s380 = scalar_select %p379, %s378, 4
        %s381 = smul.u32 128, %s380
        %p382 = scmp.lt.s32.totalorder %s377, 4
        %s383 = scalar_select %p382, %s377, 4
        %s384 = smul.addr %s383, 8
        %s385 = scalar_lea.vmem %s1, %s384
        %s386 = smul.u32 4, %s20
        %s387 = ssub.s32 5, %s386
        %p388 = scmp.lt.s32.totalorder %s387, 4
        %s389 = scalar_select %p388, %s387, 4
        %s390 = smul.u32 128, %s389
        %s391 = smul.u32 4, %s20
        %s392 = ssub.s32 5, %s391
        %p393 = scmp.lt.s32.totalorder %s392, 4
        %s394 = scalar_select %p393, %s392, 4
        %s395 = smul.u32 64, %s394
        %v397 = vld [vmem:[%s371] sm:$0xff]
        %v398 = vld [vmem:[%s371 + $0x8] sm:$0xff]
        %v399 = vld [vmem:[%s371 + $0x10] sm:$0xff]
        %v400 = vld [vmem:[%s371 + $0x18] sm:$0xff]
        %v401 = vld [vmem:[%s385] sm:$0xff]
        %v402 = vld [vmem:[%s385 + $0x8] sm:$0xff]
        %v403 = vld [vmem:[%s385 + $0x10] sm:$0xff]
        %v404 = vld [vmem:[%s385 + $0x18] sm:$0xff]
        %v405 = vld [vmem:[%s4] sm:$0x1]
        %v406 = vld [vmem:[%s2] sm:$0x1]
        %408 = vset.pattern.permute.xlu0 0
        %409 = vperm.xlu0 %408, %v397
        %v410 = vpop.permute.xlu0 %409
        %413 = vset.pattern.permute.xlu0 0
        %414 = vperm.xlu0 %413, %v398
        %v415 = vpop.permute.xlu0 %414
        %418 = vset.pattern.permute.xlu0 0
        %419 = vperm.xlu0 %418, %v399
        %v420 = vpop.permute.xlu0 %419
        %423 = vset.pattern.permute.xlu0 0
        %424 = vperm.xlu0 %423, %v400
        %v425 = vpop.permute.xlu0 %424
        %v427 = vlaneseq
        %v428 = vshrl.u32 %v427, 7
        %v429 = vsub.s32 0, %v428
        %v430 = vrot.slane %v406, %v429
        %v431 = vmul.f32 %v410, %v430
        %v432 = vmul.f32 %v415, %v430
        %v433 = vmul.f32 %v420, %v430
        %v434 = vmul.f32 %v425, %v430
        %v436 = vlaneseq
        %v437 = vshrl.u32 %v436, 7
        %v438 = vsub.s32 0, %v437
        %v439 = vrot.slane %v405, %v438
        %v441 = vadd.f32 %v439, %v431
        %v442 = vadd.f32 %v439, %v432
        %v443 = vadd.f32 %v439, %v433
        %v444 = vadd.f32 %v439, %v434
        %v445 = vld [vmem:[%s2 + $0x1] sm:$0x1]
        %446 = vset.pattern.permute.xlu0 1
        %447 = vperm.xlu0 %446, %v397
        %v448 = vpop.permute.xlu0 %447
        %450 = vset.pattern.permute.xlu0 1
        %451 = vperm.xlu0 %450, %v398
        %v452 = vpop.permute.xlu0 %451
        %454 = vset.pattern.permute.xlu0 1
        %455 = vperm.xlu0 %454, %v399
        %v456 = vpop.permute.xlu0 %455
        %458 = vset.pattern.permute.xlu0 1
        %459 = vperm.xlu0 %458, %v400
        %v460 = vpop.permute.xlu0 %459
        %v462 = vlaneseq
        %v463 = vshrl.u32 %v462, 7
        %v464 = vsub.s32 0, %v463
        %v465 = vrot.slane %v445, %v464
        %v466 = vmul.f32 %v448, %v465
        %v467 = vmul.f32 %v452, %v465
        %v468 = vmul.f32 %v456, %v465
        %v469 = vmul.f32 %v460, %v465
        %v470 = vadd.f32 %v441, %v466
        %v471 = vadd.f32 %v442, %v467
        %v472 = vadd.f32 %v443, %v468
        %v473 = vadd.f32 %v444, %v469
        %v474 = vld [vmem:[%s3] sm:$0x1]
        %476 = vset.pattern.permute.xlu0 0
        %477 = vperm.xlu0 %476, %v401
        %v478 = vpop.permute.xlu0 %477
        %481 = vset.pattern.permute.xlu0 0
        %482 = vperm.xlu0 %481, %v402
        %v483 = vpop.permute.xlu0 %482
        %486 = vset.pattern.permute.xlu0 0
        %487 = vperm.xlu0 %486, %v403
        %v488 = vpop.permute.xlu0 %487
        %491 = vset.pattern.permute.xlu0 0
        %492 = vperm.xlu0 %491, %v404
        %v493 = vpop.permute.xlu0 %492
        %v495 = vlaneseq
        %v496 = vshrl.u32 %v495, 7
        %v497 = vsub.s32 0, %v496
        %v498 = vrot.slane %v474, %v497
        %v499 = vmul.f32 %v478, %v498
        %v500 = vmul.f32 %v483, %v498
        %v501 = vmul.f32 %v488, %v498
        %v502 = vmul.f32 %v493, %v498
        %v503 = vadd.f32 %v470, %v499
        %v504 = vadd.f32 %v471, %v500
        %v505 = vadd.f32 %v472, %v501
        %v506 = vadd.f32 %v473, %v502
        %v507 = vld [vmem:[%s3 + $0x1] sm:$0x1]
        %508 = vset.pattern.permute.xlu0 1
        %509 = vperm.xlu0 %508, %v401
        %v510 = vpop.permute.xlu0 %509
        %512 = vset.pattern.permute.xlu0 1
        %513 = vperm.xlu0 %512, %v402
        %v514 = vpop.permute.xlu0 %513
        %516 = vset.pattern.permute.xlu0 1
        %517 = vperm.xlu0 %516, %v403
        %v518 = vpop.permute.xlu0 %517
        %520 = vset.pattern.permute.xlu0 1
        %521 = vperm.xlu0 %520, %v404
        %v522 = vpop.permute.xlu0 %521
        %v524 = vlaneseq
        %v525 = vshrl.u32 %v524, 7
        %v526 = vsub.s32 0, %v525
        %v527 = vrot.slane %v507, %v526
        %v528 = vmul.f32 %v510, %v527
        %v529 = vmul.f32 %v514, %v527
        %v530 = vmul.f32 %v518, %v527
        %v531 = vmul.f32 %v522, %v527
        %v532 = vadd.f32 %v503, %v528
        %v533 = vadd.f32 %v504, %v529
        %v534 = vadd.f32 %v505, %v530
        %v535 = vadd.f32 %v506, %v531
        %v536 = vld [vmem:[%s3 + $0x2] sm:$0x1]
        %537 = vset.pattern.permute.xlu0 2
        %538 = vperm.xlu0 %537, %v401
        %v539 = vpop.permute.xlu0 %538
        %541 = vset.pattern.permute.xlu0 2
        %542 = vperm.xlu0 %541, %v402
        %v543 = vpop.permute.xlu0 %542
        %545 = vset.pattern.permute.xlu0 2
        %546 = vperm.xlu0 %545, %v403
        %v547 = vpop.permute.xlu0 %546
        %549 = vset.pattern.permute.xlu0 2
        %550 = vperm.xlu0 %549, %v404
        %v551 = vpop.permute.xlu0 %550
        %v553 = vlaneseq
        %v554 = vshrl.u32 %v553, 7
        %v555 = vsub.s32 0, %v554
        %v556 = vrot.slane %v536, %v555
        %v557 = vmul.f32 %v539, %v556
        %v558 = vmul.f32 %v543, %v556
        %v559 = vmul.f32 %v547, %v556
        %v560 = vmul.f32 %v551, %v556
        %v561 = vadd.f32 %v532, %v557
        %v562 = vadd.f32 %v533, %v558
        %v563 = vadd.f32 %v534, %v559
        %v564 = vadd.f32 %v535, %v560
        %v565 = vld [vmem:[%s3 + $0x3] sm:$0x1]
        %566 = vset.pattern.permute.xlu0 3
        %567 = vperm.xlu0 %566, %v401
        %v568 = vpop.permute.xlu0 %567
        %570 = vset.pattern.permute.xlu0 3
        %571 = vperm.xlu0 %570, %v402
        %v572 = vpop.permute.xlu0 %571
        %574 = vset.pattern.permute.xlu0 3
        %575 = vperm.xlu0 %574, %v403
        %v576 = vpop.permute.xlu0 %575
        %578 = vset.pattern.permute.xlu0 3
        %579 = vperm.xlu0 %578, %v404
        %v580 = vpop.permute.xlu0 %579
        %v582 = vlaneseq
        %v583 = vshrl.u32 %v582, 7
        %v584 = vsub.s32 0, %v583
        %v585 = vrot.slane %v565, %v584
        %v586 = vmul.f32 %v568, %v585
        %v587 = vmul.f32 %v572, %v585
        %v588 = vmul.f32 %v576, %v585
        %v589 = vmul.f32 %v580, %v585
        %v590 = vadd.f32 %v561, %v586
        %v591 = vadd.f32 %v562, %v587
        %v592 = vadd.f32 %v563, %v588
        %v593 = vadd.f32 %v564, %v589
        %v594 = vld [vmem:[%s3 + $0x4] sm:$0x1]
        %595 = vset.pattern.permute.xlu0 4
        %596 = vperm.xlu0 %595, %v401
        %v597 = vpop.permute.xlu0 %596
        %599 = vset.pattern.permute.xlu0 4
        %600 = vperm.xlu0 %599, %v402
        %v601 = vpop.permute.xlu0 %600
        %603 = vset.pattern.permute.xlu0 4
        %604 = vperm.xlu0 %603, %v403
        %v605 = vpop.permute.xlu0 %604
        %607 = vset.pattern.permute.xlu0 4
        %608 = vperm.xlu0 %607, %v404
        %v609 = vpop.permute.xlu0 %608
        %v611 = vlaneseq
        %v612 = vshrl.u32 %v611, 7
        %v613 = vsub.s32 0, %v612
        %v614 = vrot.slane %v594, %v613
        %v615 = vmul.f32 %v597, %v614
        %v616 = vmul.f32 %v601, %v614
        %v617 = vmul.f32 %v605, %v614
        %v618 = vmul.f32 %v609, %v614
        %v619 = vadd.f32 %v590, %v615
        %v620 = vadd.f32 %v591, %v616
        %v621 = vadd.f32 %v592, %v617
        %v622 = vadd.f32 %v593, %v618
        %v623 = vld [vmem:[%s3 + $0x5] sm:$0x1]
        %624 = vset.pattern.permute.xlu0 5
        %625 = vperm.xlu0 %624, %v401
        %v626 = vpop.permute.xlu0 %625
        %628 = vset.pattern.permute.xlu0 5
        %629 = vperm.xlu0 %628, %v402
        %v630 = vpop.permute.xlu0 %629
        %632 = vset.pattern.permute.xlu0 5
        %633 = vperm.xlu0 %632, %v403
        %v634 = vpop.permute.xlu0 %633
        %636 = vset.pattern.permute.xlu0 5
        %637 = vperm.xlu0 %636, %v404
        %v638 = vpop.permute.xlu0 %637
        %v640 = vlaneseq
        %v641 = vshrl.u32 %v640, 7
        %v642 = vsub.s32 0, %v641
        %v643 = vrot.slane %v623, %v642
        %v644 = vmul.f32 %v626, %v643
        %v645 = vmul.f32 %v630, %v643
        %v646 = vmul.f32 %v634, %v643
        %v647 = vmul.f32 %v638, %v643
        %v648 = vadd.f32 %v619, %v644
        %v649 = vadd.f32 %v620, %v645
        %v650 = vadd.f32 %v621, %v646
        %v651 = vadd.f32 %v622, %v647
        %v652 = vld [vmem:[%s3 + $0x6] sm:$0x1]
        %653 = vset.pattern.permute.xlu0 6
        %654 = vperm.xlu0 %653, %v401
        %v655 = vpop.permute.xlu0 %654
        %657 = vset.pattern.permute.xlu0 6
        %658 = vperm.xlu0 %657, %v402
        %v659 = vpop.permute.xlu0 %658
        %661 = vset.pattern.permute.xlu0 6
        %662 = vperm.xlu0 %661, %v403
        %v663 = vpop.permute.xlu0 %662
        %665 = vset.pattern.permute.xlu0 6
        %666 = vperm.xlu0 %665, %v404
        %v667 = vpop.permute.xlu0 %666
        %v669 = vlaneseq
        %v670 = vshrl.u32 %v669, 7
        %v671 = vsub.s32 0, %v670
        %v672 = vrot.slane %v652, %v671
        %v673 = vmul.f32 %v655, %v672
        %v674 = vmul.f32 %v659, %v672
        %v675 = vmul.f32 %v663, %v672
        %v676 = vmul.f32 %v667, %v672
        %v677 = vadd.f32 %v648, %v673
        %v678 = vadd.f32 %v649, %v674
        %v679 = vadd.f32 %v650, %v675
        %v680 = vadd.f32 %v651, %v676
        %v681 = vld [vmem:[%s3 + $0x7] sm:$0x1]
        %682 = vset.pattern.permute.xlu0 7
        %683 = vperm.xlu0 %682, %v401
        %v684 = vpop.permute.xlu0 %683
        %686 = vset.pattern.permute.xlu0 7
        %687 = vperm.xlu0 %686, %v402
        %v688 = vpop.permute.xlu0 %687
        %690 = vset.pattern.permute.xlu0 7
        %691 = vperm.xlu0 %690, %v403
        %v692 = vpop.permute.xlu0 %691
        %694 = vset.pattern.permute.xlu0 7
        %695 = vperm.xlu0 %694, %v404
        %v696 = vpop.permute.xlu0 %695
        %v698 = vlaneseq
        %v699 = vshrl.u32 %v698, 7
        %v700 = vsub.s32 0, %v699
        %v701 = vrot.slane %v681, %v700
        %v702 = vmul.f32 %v684, %v701
        %v703 = vmul.f32 %v688, %v701
        %v704 = vmul.f32 %v692, %v701
        %v705 = vmul.f32 %v696, %v701
        %v706 = vadd.f32 %v677, %v702
        %v707 = vadd.f32 %v678, %v703
        %v708 = vadd.f32 %v679, %v704
        %v709 = vadd.f32 %v680, %v705
        %v710 = vld [vmem:[%s3 + $0x8] sm:$0x1]
        %711 = vset.pattern.permute.xlu0 8
        %712 = vperm.xlu0 %711, %v401
        %v713 = vpop.permute.xlu0 %712
        %715 = vset.pattern.permute.xlu0 8
        %716 = vperm.xlu0 %715, %v402
        %v717 = vpop.permute.xlu0 %716
        %719 = vset.pattern.permute.xlu0 8
        %720 = vperm.xlu0 %719, %v403
        %v721 = vpop.permute.xlu0 %720
        %723 = vset.pattern.permute.xlu0 8
        %724 = vperm.xlu0 %723, %v404
        %v725 = vpop.permute.xlu0 %724
        %v727 = vlaneseq
        %v728 = vshrl.u32 %v727, 7
        %v729 = vsub.s32 0, %v728
        %v730 = vrot.slane %v710, %v729
        %v731 = vmul.f32 %v713, %v730
        %v732 = vmul.f32 %v717, %v730
        %v733 = vmul.f32 %v721, %v730
        %v734 = vmul.f32 %v725, %v730
        %v735 = vadd.f32 %v706, %v731
        %v736 = vadd.f32 %v707, %v732
        %v737 = vadd.f32 %v708, %v733
        %v738 = vadd.f32 %v709, %v734
        %v739 = vmax.f32 %v735, 0.0
        %v740 = vmax.f32 %v736, 0.0
        %v741 = vmax.f32 %v737, 0.0
        %v742 = vmax.f32 %v738, 0.0
        %v743 = vpack.c.bf16 %v740, %v739
        %v744 = vpack.c.bf16 %v742, %v741
        %v745 = vld [vmem:[%s5] sm:$0xf]
        %v746 = vld [vmem:[%s5 + $0x4] sm:$0xf]
        %v747 = vld [vmem:[%s5 + $0x8] sm:$0xf]
        %v748 = vld [vmem:[%s5 + $0xc] sm:$0xf]
        %v749 = vld [vmem:[%s5 + $0x10] sm:$0xf]
        %v750 = vld [vmem:[%s5 + $0x14] sm:$0xf]
        %v751 = vld [vmem:[%s5 + $0x18] sm:$0xf]
        %v752 = vld [vmem:[%s5 + $0x1c] sm:$0xf]
        %v753 = vld [vmem:[%s5 + $0x20] sm:$0xf]
        %v754 = vld [vmem:[%s5 + $0x24] sm:$0xf]
        %v755 = vld [vmem:[%s5 + $0x28] sm:$0xf]
        %v756 = vld [vmem:[%s5 + $0x2c] sm:$0xf]
        %v757 = vld [vmem:[%s5 + $0x30] sm:$0xf]
        %v758 = vld [vmem:[%s5 + $0x34] sm:$0xf]
        %v759 = vld [vmem:[%s5 + $0x38] sm:$0xf]
        %v760 = vld [vmem:[%s5 + $0x3c] sm:$0xf]
        %v761 = vld [vmem:[%s6] sm:$0x1]
        %v763 = vlaneseq
        %v764 = vshrl.u32 %v763, 7
        %v765 = vsub.s32 0, %v764
        %v766 = vrot.slane %v761, %v765
        %v784 = vunpack.c.l.b16 %v745
        %v785 = vunpack.c.l.b16 %v746
        %v786 = vunpack.c.l.b16 %v747
        %v787 = vunpack.c.l.b16 %v748
        %v788 = vunpack.c.l.b16 %v749
        %v789 = vunpack.c.l.b16 %v750
        %v790 = vunpack.c.l.b16 %v751
        %v791 = vunpack.c.l.b16 %v752
        %v792 = vunpack.c.l.b16 %v753
        %v793 = vunpack.c.l.b16 %v754
        %v794 = vunpack.c.l.b16 %v755
        %v795 = vunpack.c.l.b16 %v756
        %v796 = vunpack.c.l.b16 %v757
        %v797 = vunpack.c.l.b16 %v758
        %v798 = vunpack.c.l.b16 %v759
        %v799 = vunpack.c.l.b16 %v760
        %v800 = vpack.c.b16 %v785, %v784
        %v801 = vpack.c.b16 %v787, %v786
        %v802 = vpack.c.b16 %v789, %v788
        %v803 = vpack.c.b16 %v791, %v790
        %v804 = vpack.c.b16 %v793, %v792
        %v805 = vpack.c.b16 %v795, %v794
        %v806 = vpack.c.b16 %v797, %v796
        %v807 = vpack.c.b16 %v799, %v798
        %816 = vmatprep.subr.bf16.mxu0 0
        %817 = vmatpush1.bf16.msra.mxu0 %v807
        %818 = vmatprep.subr.bf16.mxu0 0
        %819 = vmatpush1.bf16.msra.mxu0 %v806
        %820 = vmatprep.subr.bf16.mxu0 0
        %821 = vmatpush1.bf16.msra.mxu0 %v805
        %822 = vmatprep.subr.bf16.mxu0 0
        %823 = vmatpush1.bf16.msra.mxu0 %v804
        %824 = vmatprep.subr.bf16.mxu0 0
        %825 = vmatpush1.bf16.msra.mxu0 %v803
        %826 = vmatprep.subr.bf16.mxu0 0
        %827 = vmatpush1.bf16.msra.mxu0 %v802
        %828 = vmatprep.subr.bf16.mxu0 0
        %829 = vmatpush1.bf16.msra.mxu0 %v801
        %830 = vmatprep.subr.bf16.mxu0 0
        %831 = vmatpush1.bf16.msra.mxu0 %v800
        %832 = vmatprep.subr.bf16.mxu0 0
        %833 = vmatpush2.bf16.msra.mxu0 0
        %834 = vmatprep.subr.bf16.mxu0 0
        %835 = vmatpush2.bf16.msra.mxu0 0
        %836 = vmatprep.subr.bf16.mxu0 0
        %837 = vmatpush2.bf16.msra.mxu0 0
        %838 = vmatprep.subr.bf16.mxu0 0
        %839 = vmatpush2.bf16.msra.mxu0 0
        %840 = vmatprep.subr.bf16.mxu0 0
        %841 = vmatpush2.bf16.msra.mxu0 0
        %842 = vmatprep.subr.bf16.mxu0 0
        %843 = vmatpush2.bf16.msra.mxu0 0
        %844 = vmatprep.subr.bf16.mxu0 0
        %845 = vmatpush2.bf16.msra.mxu0 0
        %846 = vmatprep.subr.bf16.mxu0 0
        %847 = vmatpush2.bf16.msra.mxu0 0
        %848 = vmatprep.mubr.bf16.mxu0 0
        %849 = vmatmul.mubr.bf16.gmra.mxu0 %v743
        %v850 = vpop.f32.mrf.mxu0
        %v851 = vadd.f32 %v766, %v850
        %v852 = vpop.f32.mrf.mxu0
        %v853 = vpop.f32.mrf.mxu0
        %v854 = vadd.f32 %v766, %v853
        %v855 = vpop.f32.mrf.mxu0
        %856 = vmatprep.mubr.bf16.mxu0 0
        %857 = vmatmul.mubr.bf16.gmra.mxu0 %v744
        %v858 = vpop.f32.mrf.mxu0
        %v859 = vadd.f32 %v766, %v858
        %v860 = vpop.f32.mrf.mxu0
        %v861 = vpop.f32.mrf.mxu0
        %v862 = vadd.f32 %v766, %v861
        %v863 = vpop.f32.mrf.mxu0
        %864 = vdwg.mxu0
        %v865 = vld [vmem:[%s7] sm:$0x1]
        %v866 = vld [vmem:[%s8] sm:$0x1]
        %867 = vadd.xlane.f32.xlu0 %v851
        %v868 = vpop.xlane.xlu0 %867
        %869 = vadd.xlane.f32.xlu0 %v854
        %v870 = vpop.xlane.xlu0 %869
        %871 = vadd.xlane.f32.xlu0 %v859
        %v872 = vpop.xlane.xlu0 %871
        %873 = vadd.xlane.f32.xlu0 %v862
        %v874 = vpop.xlane.xlu0 %873
        %v875 = vrcp.pop 128.0
        %v876 = vmul.f32 %v868, %v875
        %v877 = vmul.f32 %v870, %v875
        %v878 = vmul.f32 %v872, %v875
        %v879 = vmul.f32 %v874, %v875
        %v880 = vmul.f32 %v851, %v851
        %v881 = vmul.f32 %v854, %v854
        %v882 = vmul.f32 %v859, %v859
        %v883 = vmul.f32 %v862, %v862
        %884 = vadd.xlane.f32.xlu0 %v880
        %v885 = vpop.xlane.xlu0 %884
        %886 = vadd.xlane.f32.xlu0 %v881
        %v887 = vpop.xlane.xlu0 %886
        %888 = vadd.xlane.f32.xlu0 %v882
        %v889 = vpop.xlane.xlu0 %888
        %890 = vadd.xlane.f32.xlu0 %v883
        %v891 = vpop.xlane.xlu0 %890
        %v892 = vmul.f32 %v885, %v875
        %v893 = vmul.f32 %v887, %v875
        %v894 = vmul.f32 %v889, %v875
        %v895 = vmul.f32 %v891, %v875
        %v896 = vmul.f32 %v876, %v876
        %v897 = vmul.f32 %v877, %v877
        %v898 = vmul.f32 %v878, %v878
        %v899 = vmul.f32 %v879, %v879
        %v900 = vsub.f32 %v892, %v896
        %v901 = vsub.f32 %v893, %v897
        %v902 = vsub.f32 %v894, %v898
        %v903 = vsub.f32 %v895, %v899
        %v904 = vsub.f32 %v851, %v876
        %v905 = vsub.f32 %v854, %v877
        %v906 = vsub.f32 %v859, %v878
        %v907 = vsub.f32 %v862, %v879
        %v908 = vadd.f32 %v900, 1e-05
        %v909 = vadd.f32 %v901, 1e-05
        %v910 = vadd.f32 %v902, 1e-05
        %v911 = vadd.f32 %v903, 1e-05
        %v912 = vrsqrt.pop %v908
        %v913 = vrsqrt.pop %v909
        %v914 = vrsqrt.pop %v910
        %v915 = vrsqrt.pop %v911
        %v916 = vmul.f32 %v904, %v912
        %v917 = vmul.f32 %v905, %v913
        %v918 = vmul.f32 %v906, %v914
        %v919 = vmul.f32 %v907, %v915
        %v921 = vlaneseq
        %v922 = vshrl.u32 %v921, 7
        %v923 = vsub.s32 0, %v922
        %v924 = vrot.slane %v865, %v923
        %v926 = vmul.f32 %v916, %v924
        %v927 = vmul.f32 %v917, %v924
        %v928 = vmul.f32 %v918, %v924
        %v929 = vmul.f32 %v919, %v924
        %v931 = vlaneseq
        %v932 = vshrl.u32 %v931, 7
        %v933 = vsub.s32 0, %v932
        %v934 = vrot.slane %v866, %v933
        %v936 = vadd.f32 %v926, %v934
        %v937 = vadd.f32 %v927, %v934
        %v938 = vadd.f32 %v928, %v934
        %v939 = vadd.f32 %v929, %v934
        %v940 = vpack.c.bf16 %v937, %v936
        %v941 = vpack.c.bf16 %v939, %v938
        %v944 = vunpack.c.l.b16 %v940
        %v945 = vunpack.c.h.b16 %v940
        %v946 = vunpack.c.l.b16 %v941
        %v947 = vunpack.c.h.b16 %v941
        %v948 = vpack.c.b16 %v944, %v944
        %v949 = vpack.c.b16 %v945, %v945
        %v950 = vpack.c.b16 %v946, %v946
        %v951 = vpack.c.b16 %v947, %v947
        %956 = vst [vmem:[%s362] sm:$0xf] %v948
        %957 = vst [vmem:[%s362 + $0x4] sm:$0xf] %v949
        %958 = vst [vmem:[%s362 + $0x8] sm:$0xf] %v950
        %959 = vst [vmem:[%s362 + $0xc] sm:$0xf] %v951
        %s960 = sand.u32 %s227, 1
        %s961 = sand.u32 %s227, 1
        %s962 = smul.addr %s961, 16
        %s963 = scalar_lea.vmem [#allocation2], %s962
        // Predicated region
        $region57: #{encoder_forward.2} parent=55 // pred_check
          %p964 = pneg %p237
        $region58: #{encoder_forward.2} parent=55 // pred_check_branch
          %966 = sbr.rel (%p964) target = $region60
        $region59: #{encoder_forward.2} parent=55 // pred_region
          %s967 = smul.u32 4, %s20
          %s968 = ssub.s32 5, %s967
          %p969 = scmp.lt.s32.totalorder %s968, 4
          %s970 = scalar_select %p969, %s968, 4
          %s971 = smul.u32 64, %s970
          %p972 = scmp.ne.s32.totalorder 0, %s971
          %s973 = smul.addr %s967, 4
          %s974 = scalar_lea.vmem %s9, %s973
          // Predicated region
          $region61: #{encoder_forward.2} parent=59 // pred_check
            %p975 = pneg %p972
          $region62: #{encoder_forward.2} parent=59 // pred_check_branch
            %977 = sbr.rel (%p975) target = $region64
          $region63: #{encoder_forward.2} parent=59 // pred_region
            // Predicated region
            $region65: #{encoder_forward.2} parent=63 // pred_check
              _
            $region66: #{encoder_forward.2} parent=63 // pred_check_branch
              %979 = sbr.rel target = $region68
            $region67: #{encoder_forward.2} parent=63 // pred_region
              // Predicated region
              $region87: #{encoder_forward.2} parent=67 // pred_check
                _
              $region88: #{encoder_forward.2} parent=67 // pred_check_branch
                %1035 = sbr.rel (0) target = $region90
              $region89: #{encoder_forward.2} parent=67 // pred_region
                %s1037 = ssub.s32 16, 1
                %s1038 = sshrl.u32 %s970, 2
                // While loop
                $region91: #{encoder_forward.2} parent=89 // loop_pre_header
                  _
                $region92: #{encoder_forward.2} parent=89 // loop_header
                  %s1040 = sphi 0, %s1042
                  %p1041 = scmp.ge.s32.totalorder %s1040, %s1038
                  %s1045 = sphi 0, %s1058
                  %s1046 = sphi %s963, %s1061
                  %s1047 = sphi %s974, %s1062
                $region93: #{encoder_forward.2} parent=89 // loop_header_branch
                  %1044 = sbr.rel (%p1041) target = $region97
                $region94: #{encoder_forward.2} parent=89 // loop_body
                  %v1048 = vld [vmem:[%s1046] sm:%s1037]
                  %1049 = vst [vmem:[%s1047] sm:%s1037] %v1048
                  %v1050 = vld [vmem:[%s1046 + $0x4] sm:%s1037]
                  %1051 = vst [vmem:[%s1047 + $0x4] sm:%s1037] %v1050
                  %v1052 = vld [vmem:[%s1046 + $0x8] sm:%s1037]
                  %1053 = vst [vmem:[%s1047 + $0x8] sm:%s1037] %v1052
                  %v1054 = vld [vmem:[%s1046 + $0xc] sm:%s1037]
                  %1055 = vst [vmem:[%s1047 + $0xc] sm:%s1037] %v1054
                  %s1056 = sadd.s32 1, %s1045
                  %p1057 = scmp.ge.s32.totalorder %s1056, %s1038
                  %s1058 = scalar_select %p1057, 0, %s1056
                  %s1059 = smul.u32 %s1058, 16
                  %s1060 = smul.u32 %s1058, 16
                  %s1061 = scalar_lea.vmem %s963, %s1059 [#allocation2]
                  %s1062 = scalar_lea.vmem %s974, %s1060
                $region95: #{encoder_forward.2} parent=89 // loop_footer
                  %s1042 = sadd.s32 %s1040, 1
                $region96: #{encoder_forward.2} parent=89 // loop_footer_branch
                  %1039 = sbr.rel target = $region92
                $region97: #{encoder_forward.2} parent=89 // loop_exit
                  _
                %s1063 = sshrl.u32 %s970, 2
                %s1064 = sand.u32 %s970, 3
                %s1065 = smul.u32 %s1063, 4
                %s1066 = smul.u32 4, %s1065
                %s1067 = scalar_lea.vmem %s963, %s1066 [#allocation2]
                %s1068 = smul.u32 4, %s1065
                %s1069 = scalar_lea.vmem %s974, %s1068
                // While loop
                $region98: #{encoder_forward.2} parent=89 // loop_pre_header
                  _
                $region99: #{encoder_forward.2} parent=89 // loop_header
                  %s1071 = sphi 0, %s1073
                  %p1072 = scmp.ge.s32.totalorder %s1071, %s1064
                  %s1076 = sphi 0, %s1083
                  %s1077 = sphi %s1067, %s1086
                  %s1078 = sphi %s1069, %s1087
                $region100: #{encoder_forward.2} parent=89 // loop_header_branch
                  %1075 = sbr.rel (%p1072) target = $region104
                $region101: #{encoder_forward.2} parent=89 // loop_body
                  %v1079 = vld [vmem:[%s1077] sm:%s1037]
                  %1080 = vst [vmem:[%s1078] sm:%s1037] %v1079
                  %s1081 = sadd.s32 1, %s1076
                  %p1082 = scmp.ge.s32.totalorder %s1081, %s1064
                  %s1083 = scalar_select %p1082, 0, %s1081
                  %s1084 = smul.u32 %s1083, 4
                  %s1085 = smul.u32 %s1083, 4
                  %s1086 = scalar_lea.vmem %s1067, %s1084 [#allocation2]
                  %s1087 = scalar_lea.vmem %s1069, %s1085
                $region102: #{encoder_forward.2} parent=89 // loop_footer
                  %s1073 = sadd.s32 %s1071, 1
                $region103: #{encoder_forward.2} parent=89 // loop_footer_branch
                  %1070 = sbr.rel target = $region99
                $region104: #{encoder_forward.2} parent=89 // loop_exit
                  _
              $region90: #{encoder_forward.2} parent=67 // pred_fallthru
                _
            $region68: #{encoder_forward.2} parent=63 // pred_fallthru
              _
            // Predicated region
            $region69: #{encoder_forward.2} parent=63 // pred_check
              _
            $region70: #{encoder_forward.2} parent=63 // pred_check_branch
              %981 = sbr.rel (0) target = $region72
            $region71: #{encoder_forward.2} parent=63 // pred_region
              %s983 = ssub.s32 16, 1
              %s984 = sshrl.u32 %s970, 2
              // While loop
              $region73: #{encoder_forward.2} parent=71 // loop_pre_header
                _
              $region74: #{encoder_forward.2} parent=71 // loop_header
                %s986 = sphi 0, %s988
                %p987 = scmp.ge.s32.totalorder %s986, %s984
                %s991 = sphi 0, %s1004
                %s992 = sphi %s963, %s1007
                %s993 = sphi %s974, %s1008
              $region75: #{encoder_forward.2} parent=71 // loop_header_branch
                %990 = sbr.rel (%p987) target = $region79
              $region76: #{encoder_forward.2} parent=71 // loop_body
                %v994 = vld [vmem:[%s992] sm:%s983]
                %995 = vst [vmem:[%s993] sm:%s983] %v994
                %v996 = vld [vmem:[%s992 + $0x4] sm:%s983]
                %997 = vst [vmem:[%s993 + $0x4] sm:%s983] %v996
                %v998 = vld [vmem:[%s992 + $0x8] sm:%s983]
                %999 = vst [vmem:[%s993 + $0x8] sm:%s983] %v998
                %v1000 = vld [vmem:[%s992 + $0xc] sm:%s983]
                %1001 = vst [vmem:[%s993 + $0xc] sm:%s983] %v1000
                %s1002 = sadd.s32 1, %s991
                %p1003 = scmp.ge.s32.totalorder %s1002, %s984
                %s1004 = scalar_select %p1003, 0, %s1002
                %s1005 = smul.u32 %s1004, 16
                %s1006 = smul.u32 %s1004, 16
                %s1007 = scalar_lea.vmem %s963, %s1005 [#allocation2]
                %s1008 = scalar_lea.vmem %s974, %s1006
              $region77: #{encoder_forward.2} parent=71 // loop_footer
                %s988 = sadd.s32 %s986, 1
              $region78: #{encoder_forward.2} parent=71 // loop_footer_branch
                %985 = sbr.rel target = $region74
              $region79: #{encoder_forward.2} parent=71 // loop_exit
                _
              %s1009 = sshrl.u32 %s970, 2
              %s1010 = sand.u32 %s970, 3
              %s1011 = smul.u32 %s1009, 4
              %s1012 = smul.u32 4, %s1011
              %s1013 = scalar_lea.vmem %s963, %s1012 [#allocation2]
              %s1014 = smul.u32 4, %s1011
              %s1015 = scalar_lea.vmem %s974, %s1014
              // While loop
              $region80: #{encoder_forward.2} parent=71 // loop_pre_header
                _
              $region81: #{encoder_forward.2} parent=71 // loop_header
                %s1017 = sphi 0, %s1019
                %p1018 = scmp.ge.s32.totalorder %s1017, %s1010
                %s1022 = sphi 0, %s1029
                %s1023 = sphi %s1013, %s1032
                %s1024 = sphi %s1015, %s1033
              $region82: #{encoder_forward.2} parent=71 // loop_header_branch
                %1021 = sbr.rel (%p1018) target = $region86
              $region83: #{encoder_forward.2} parent=71 // loop_body
                %v1025 = vld [vmem:[%s1023] sm:%s983]
                %1026 = vst [vmem:[%s1024] sm:%s983] %v1025
                %s1027 = sadd.s32 1, %s1022
                %p1028 = scmp.ge.s32.totalorder %s1027, %s1010
                %s1029 = scalar_select %p1028, 0, %s1027
                %s1030 = smul.u32 %s1029, 4
                %s1031 = smul.u32 %s1029, 4
                %s1032 = scalar_lea.vmem %s1013, %s1030 [#allocation2]
                %s1033 = scalar_lea.vmem %s1015, %s1031
              $region84: #{encoder_forward.2} parent=71 // loop_footer
                %s1019 = sadd.s32 %s1017, 1
              $region85: #{encoder_forward.2} parent=71 // loop_footer_branch
                %1016 = sbr.rel target = $region81
              $region86: #{encoder_forward.2} parent=71 // loop_exit
                _
            $region72: #{encoder_forward.2} parent=63 // pred_fallthru
              _
          $region64: #{encoder_forward.2} parent=59 // pred_fallthru
            _
          %1088 = vnop
        $region60: #{encoder_forward.2} parent=55 // pred_fallthru
          _
      $region56: #{encoder_forward.2} parent=5 // pred_fallthru
        _
      %p1089 = scmp.le.s32.totalorder 2, %s15
      // Predicated region
      $region105: #{encoder_forward.2} parent=5 // pred_check
        %p1090 = pneg %p1089
      $region106: #{encoder_forward.2} parent=5 // pred_check_branch
        %1092 = sbr.rel (%p1090) target = $region108
      $region107: #{encoder_forward.2} parent=5 // pred_region
        %s1093 = ssub.s32 %s15, 2
        // Predicated region
        $region109: #{encoder_forward.2} parent=107 // pred_check
          %p1094 = pneg %p243
        $region110: #{encoder_forward.2} parent=107 // pred_check_branch
          %1096 = sbr.rel (%p1094) target = $region112
        $region111: #{encoder_forward.2} parent=107 // pred_region
          %s1097 = sand.u32 %s228, 1
          %s1098 = sand.u32 %s228, 1
          %s1099 = smul.addr %s1098, 16
          %s1100 = scalar_lea.vmem [#allocation2], %s1099
        $region112: #{encoder_forward.2} parent=107 // pred_fallthru
          _
      $region108: #{encoder_forward.2} parent=5 // pred_fallthru
        _
    $region6: #{encoder_forward.2} parent=1 // loop_footer
      %s19 = sadd.s32 1, %s15
    $region7: #{encoder_forward.2} parent=1 // loop_footer_branch
      %14 = sbr.rel target = $region3
    $region8: #{encoder_forward.2} parent=1 // loop_exit
      _

</llo_original>
